<compile_context>
chip_gen: v5e
topology: v5e:2x2
jax: 0.10.0
libtpu: 0.0.40
codegen_flags: <defaults>
</compile_context>

<pallas_src>
import math
from functools import partial

import jax
import jax.numpy as jnp
from jax import lax
from jax.experimental import pallas as pl
from jax.experimental.pallas import tpu as pltpu

# dot_general dimension_numbers: contract last dim of lhs with last dim of rhs
# (i.e. x @ W^T / q @ k^T without materializing a transpose).
_NT = (((1,), (1,)), ((), ()))


def _round_up(x, m):
    return ((x + m - 1) // m) * m


# ---------------------------------------------------------------------------
# Kernel 1: fused Q/K/V projections   y = x @ W^T + b   (all three per tile)
# ---------------------------------------------------------------------------
def _qkv_proj_kernel(xq_ref, xk_ref, xv_ref,
                     wq_ref, wk_ref, wv_ref,
                     bq_ref, bk_ref, bv_ref,
                     qo_ref, ko_ref, vo_ref):
    def proj(x_ref, w_ref, b_ref, o_ref):
        acc = lax.dot_general(x_ref[...], w_ref[...], _NT,
                              preferred_element_type=jnp.float32)
        o_ref[...] = (acc + b_ref[...]).astype(o_ref.dtype)

    proj(xq_ref, wq_ref, bq_ref, qo_ref)
    proj(xk_ref, wk_ref, bk_ref, ko_ref)
    proj(xv_ref, wv_ref, bv_ref, vo_ref)


def qkv_projection(xq2d, xk2d, xv2d, wq, wk, wv, bq, bk, bv, *, tile_m=512):
    """One pallas_call computing all three projections.

    xq2d: (Mq, E), xk2d/xv2d: (Mk, E); weights torch-layout (D, E); biases (D,).
    Returns (Mq, D), (Mk, D), (Mk, D).
    """
    Mq, E = xq2d.shape
    Mk = xk2d.shape[0]
    D = wq.shape[0]

    # Row tiling: pipeline activation DMAs behind the matmul and keep VMEM
    # bounded as B*N grows; "parallel" lets multi-TC chips split the row space.
    Mmax = max(Mq, Mk)
    tm = min(tile_m, _round_up(Mmax, 8))
    Mpad = _round_up(Mmax, tm)

    def pad_rows(x):
        return x if x.shape[0] == Mpad else jnp.pad(
            x, ((0, Mpad - x.shape[0]), (0, 0)))

    xq_p, xk_p, xv_p = pad_rows(xq2d), pad_rows(xk2d), pad_rows(xv2d)

    row_spec = pl.BlockSpec((tm, E), lambda i: (i, 0))
    w_spec = pl.BlockSpec((D, E), lambda i: (0, 0))      # resident across tiles
    b_spec = pl.BlockSpec((1, D), lambda i: (0, 0))
    out_spec = pl.BlockSpec((tm, D), lambda i: (i, 0))

    qo, ko, vo = pl.pallas_call(
        _qkv_proj_kernel,
        out_shape=(jax.ShapeDtypeStruct((Mpad, D), xq2d.dtype),
                   jax.ShapeDtypeStruct((Mpad, D), xk2d.dtype),
                   jax.ShapeDtypeStruct((Mpad, D), xv2d.dtype)),
        grid=(Mpad // tm,),
        in_specs=[row_spec, row_spec, row_spec,
                  w_spec, w_spec, w_spec,
                  b_spec, b_spec, b_spec],
        out_specs=(out_spec, out_spec, out_spec),
        compiler_params=pltpu.CompilerParams(
            dimension_semantics=("parallel",)),
    )(xq_p, xk_p, xv_p, wq, wk, wv,
      bq.reshape(1, D), bk.reshape(1, D), bv.reshape(1, D))
    return qo[:Mq], ko[:Mk], vo[:Mk]


# ---------------------------------------------------------------------------
# Kernel 2: per-batch multi-head attention with fused output projection.
#   per head h: s = q_h @ k_h^T / sqrt(d); p = exp(s - max); ov = (p @ v_h)/sum
#   out = sum_h ov_h @ Wo_h^T + b_o        (all heads in one grid step)
# ---------------------------------------------------------------------------
def _attn_out_kernel(qp_ref, kp_ref, vp_ref, wo_ref, bo_ref, o_ref, *,
                     num_heads, scale):
    q = qp_ref[0]          # (Nq, D)
    k = kp_ref[0]          # (Nk, D)
    v = vp_ref[0]          # (Nk, D)
    wo = wo_ref[...]       # (E, D) torch layout, resident

    nq, d_total = q.shape
    dh = d_total // num_heads
    e_out = wo.shape[0]

    acc = jnp.zeros((nq, e_out), jnp.float32)
    for h in range(num_heads):                     # static unroll over heads
        sl = slice(h * dh, (h + 1) * dh)
        qh, kh, vh = q[:, sl], k[:, sl], v[:, sl]
        # q_h @ k_h^T without materializing a transpose of K.
        s = lax.dot_general(qh, kh, _NT,
                            preferred_element_type=jnp.float32) * scale
        m = jnp.max(s, axis=-1, keepdims=True)
        p = jnp.exp(s - m)
        denom = jnp.sum(p, axis=-1, keepdims=True)
        ov = jnp.dot(p.astype(vh.dtype), vh,
                     preferred_element_type=jnp.float32)
        # Fold softmax normalization into the (Nq, dh) output (Nk/dh fewer
        # multiplies). approx=True (EUP slot) is an option when ~1e-4 relative
        # error is acceptable; keep exact here.
        ov = ov * pl.reciprocal(denom, approx=False)
        # Fused out-projection contribution of this head: ov_h @ Wo[:, sl]^T.
        acc = acc + lax.dot_general(ov.astype(wo.dtype), wo[:, sl], _NT,
                                    preferred_element_type=jnp.float32)
    o_ref[0] = (acc + bo_ref[...]).astype(o_ref.dtype)


def attention_core(qp, kp, vp, o_w, o_b, num_heads):
    """qp: (B, Nq, D), kp/vp: (B, Nk, D), o_w: (E, D), o_b: (E,) -> (B, Nq, E)."""
    B, Nq, D = qp.shape
    Nk = kp.shape[1]
    E = o_w.shape[0]
    dh = D // num_heads
    scale = 1.0 / math.sqrt(dh)
    kernel = partial(_attn_out_kernel, num_heads=num_heads, scale=scale)
    # TODO(synk): for SAM-scale token counts (N ~ 4096) the full (Nq, Nk) f32
    # scores would exceed VMEM; this kernel would need flash-style Nk tiling
    # (online softmax with m/l/acc scratch). Not needed at these shapes.
    return pl.pallas_call(
        kernel,
        out_shape=jax.ShapeDtypeStruct((B, Nq, E), qp.dtype),
        grid=(B,),
        in_specs=[
            pl.BlockSpec((1, Nq, D), lambda b: (b, 0, 0)),
            pl.BlockSpec((1, Nk, D), lambda b: (b, 0, 0)),
            pl.BlockSpec((1, Nk, D), lambda b: (b, 0, 0)),
            pl.BlockSpec((E, D), lambda b: (0, 0)),   # resident across batches
            pl.BlockSpec((1, E), lambda b: (0, 0)),
        ],
        out_specs=pl.BlockSpec((1, Nq, E), lambda b: (b, 0, 0)),
        compiler_params=pltpu.CompilerParams(
            dimension_semantics=("parallel",)),
    )(qp, kp, vp, o_w, o_b.reshape(1, E))


# ---------------------------------------------------------------------------
# Full module forward: only free metadata reshapes in the wrapper.
# ---------------------------------------------------------------------------
def attention_forward(params, q, k, v, num_heads):
    # TODO(synk): mask branch (m is not None) of the reference forward is not
    # implemented; this covers the default m=None path exactly.
    B, Nq, E = q.shape
    Nk = k.shape[1]
    D = params["q_w"].shape[0]           # internal_dim

    qp2, kp2, vp2 = qkv_projection(
        q.reshape(B * Nq, E), k.reshape(B * Nk, E), v.reshape(B * Nk, E),
        params["q_w"], params["k_w"], params["v_w"],
        params["q_b"], params["k_b"], params["v_b"])

    qp = qp2.reshape(B, Nq, D)           # metadata reshapes only, no transposes
    kp = kp2.reshape(B, Nk, D)
    vp = vp2.reshape(B, Nk, D)

    return attention_core(qp, kp, vp, params["o_w"], params["o_b"], num_heads)


def init_params(key, embedding_dim, internal_dim):
    """Deterministic PyTorch-Linear-style init: U(-1/sqrt(fan_in), 1/sqrt(fan_in))."""
    keys = jax.random.split(key, 8)

    def lin(kw, kb, out_dim, in_dim):
        bound = 1.0 / math.sqrt(in_dim)
        w = jax.random.uniform(kw, (out_dim, in_dim), jnp.float32, -bound, bound)
        b = jax.random.uniform(kb, (out_dim,), jnp.float32, -bound, bound)
        return w, b

    q_w, q_b = lin(keys[0], keys[1], internal_dim, embedding_dim)
    k_w, k_b = lin(keys[2], keys[3], internal_dim, embedding_dim)
    v_w, v_b = lin(keys[4], keys[5], internal_dim, embedding_dim)
    o_w, o_b = lin(keys[6], keys[7], embedding_dim, internal_dim)
    return dict(q_w=q_w, q_b=q_b, k_w=k_w, k_b=k_b,
                v_w=v_w, v_b=v_b, o_w=o_w, o_b=o_b)


def reference_forward(params, q, k, v, num_heads):
    """Pure-JAX reference mirroring the PyTorch forward (m=None path)."""
    def lin(x, w, b):
        return x @ w.T + b
    B, Nq, E = q.shape
    D = params["q_w"].shape[0]
    d_head = D // num_heads
    qp = lin(q, params["q_w"], params["q_b"])
    kp = lin(k, params["k_w"], params["k_b"])
    vp = lin(v, params["v_w"], params["v_b"])
    qh = qp.reshape(B, Nq, num_heads, d_head).transpose(0, 2, 1, 3)
    kh = kp.reshape(B, -1, num_heads, d_head).transpose(0, 2, 1, 3)
    vh = vp.reshape(B, -1, num_heads, d_head).transpose(0, 2, 1, 3)
    attn = jnp.einsum("bhqd,bhkd->bhqk", qh, kh) / math.sqrt(d_head)
    attn = jax.nn.softmax(attn, axis=-1)
    oh = jnp.einsum("bhqk,bhkd->bhqd", attn, vh)
    o = oh.transpose(0, 2, 1, 3).reshape(B, Nq, D)
    return lin(o, params["o_w"], params["o_b"])


if __name__ == "__main__":
    embedding_dim = 32
    num_heads = 4
    downsample_rate = 1
    internal_dim = embedding_dim // downsample_rate

    B, Nq, Nk = 2, 8, 8

    key = jax.random.PRNGKey(0)
    kp_, kq, kk, kv = jax.random.split(key, 4)
    params = init_params(kp_, embedding_dim, internal_dim)

    q = jax.random.normal(kq, (B, Nq, embedding_dim), jnp.float32)
    k = jax.random.normal(kk, (B, Nk, embedding_dim), jnp.float32)
    v = jax.random.normal(kv, (B, Nk, embedding_dim), jnp.float32)

    fwd = jax.jit(attention_forward, static_argnums=(4,))
    out = fwd(params, q, k, v, num_heads)
    out = jax.block_until_ready(out)

    ref = reference_forward(params, q, k, v, num_heads)
    assert out.shape == (B, Nq, embedding_dim)
    assert jnp.allclose(out, ref, atol=1e-3, rtol=1e-3), "mismatch vs reference"

    print("KERNEL_OK")
</pallas_src>

<mosaic_0001>
module attributes {stable_mosaic.version = 11 : i64} {
  func.func @_attn_out_kernel(%arg0: i32, %arg1: memref<1x8x32xf32, #tpu.memory_space<vmem>>, %arg2: memref<1x8x32xf32, #tpu.memory_space<vmem>>, %arg3: memref<1x8x32xf32, #tpu.memory_space<vmem>>, %arg4: memref<32x32xf32, #tpu.memory_space<vmem>>, %arg5: memref<1x32xf32, #tpu.memory_space<vmem>>, %arg6: memref<1x8x32xf32, #tpu.memory_space<vmem>>) attributes {dimension_semantics = [#tpu.dimension_semantics<parallel>], iteration_bounds = array<i64: 2>, scalar_prefetch = 0 : i64, scratch_operands = 0 : i64, tpu.core_type = #tpu.core_type<tc>, window_params = [{transform_indices = @transform_0, window_bounds = array<i64: 1, 8, 32>}, {transform_indices = @transform_1, window_bounds = array<i64: 1, 8, 32>}, {transform_indices = @transform_2, window_bounds = array<i64: 1, 8, 32>}, {pipeline_mode = #tpu.pipeline_mode<synchronous>, transform_indices = @transform_3, window_bounds = array<i64: 32, 32>}, {pipeline_mode = #tpu.pipeline_mode<synchronous>, transform_indices = @transform_4, window_bounds = array<i64: 1, 32>}, {transform_indices = @transform_5, window_bounds = array<i64: 1, 8, 32>}]} {
    %c0 = arith.constant 0 : index
    %c0_0 = arith.constant 0 : index
    %c0_1 = arith.constant 0 : index
    %0 = vector.load %arg1[%c0, %c0_0, %c0_1] : memref<1x8x32xf32, #tpu.memory_space<vmem>>, vector<1x8x32xf32>
    %1 = vector.shape_cast %0 : vector<1x8x32xf32> to vector<8x32xf32>
    %c0_2 = arith.constant 0 : index
    %c0_3 = arith.constant 0 : index
    %c0_4 = arith.constant 0 : index
    %2 = vector.load %arg2[%c0_2, %c0_3, %c0_4] : memref<1x8x32xf32, #tpu.memory_space<vmem>>, vector<1x8x32xf32>
    %3 = vector.shape_cast %2 : vector<1x8x32xf32> to vector<8x32xf32>
    %c0_5 = arith.constant 0 : index
    %c0_6 = arith.constant 0 : index
    %c0_7 = arith.constant 0 : index
    %4 = vector.load %arg3[%c0_5, %c0_6, %c0_7] : memref<1x8x32xf32, #tpu.memory_space<vmem>>, vector<1x8x32xf32>
    %5 = vector.shape_cast %4 : vector<1x8x32xf32> to vector<8x32xf32>
    %c0_8 = arith.constant 0 : index
    %c0_9 = arith.constant 0 : index
    %6 = vector.load %arg4[%c0_8, %c0_9] : memref<32x32xf32, #tpu.memory_space<vmem>>, vector<32x32xf32>
    %cst = arith.constant 0.000000e+00 : f32
    %7 = vector.broadcast %cst : f32 to vector<8x32xf32>
    %8 = vector.extract_strided_slice %1 {offsets = [0, 0], sizes = [8, 8], strides = [1, 1]} : vector<8x32xf32> to vector<8x8xf32>
    %9 = vector.extract_strided_slice %3 {offsets = [0, 0], sizes = [8, 8], strides = [1, 1]} : vector<8x32xf32> to vector<8x8xf32>
    %10 = vector.extract_strided_slice %5 {offsets = [0, 0], sizes = [8, 8], strides = [1, 1]} : vector<8x32xf32> to vector<8x8xf32>
    %cst_10 = arith.constant dense<0.000000e+00> : vector<8x8xf32>
    %11 = tpu.matmul %8, %9, %cst_10 {dimension_numbers = #tpu.dot_dimension_numbers<[1], [1], [0], [0], [0, 0, 1, 0], [], []>} : vector<8x8xf32>, vector<8x8xf32>, vector<8x8xf32> -> vector<8x8xf32>
    %cst_11 = arith.constant 0.353553385 : f32
    %12 = vector.broadcast %cst_11 : f32 to vector<8x8xf32>
    %13 = arith.mulf %11, %12 : vector<8x8xf32>
    %cst_12 = arith.constant dense<0xFF800000> : vector<8xf32>
    %14 = vector.multi_reduction <maximumf>, %13, %cst_12 [1] : vector<8x8xf32> to vector<8xf32>
    %15 = vector.shape_cast %14 : vector<8xf32> to vector<8x1xf32>
    %16 = vector.broadcast %15 : vector<8x1xf32> to vector<8x8xf32>
    %17 = arith.subf %13, %16 : vector<8x8xf32>
    %18 = math.exp %17 : vector<8x8xf32>
    %cst_13 = arith.constant dense<0.000000e+00> : vector<8xf32>
    %19 = vector.multi_reduction <add>, %18, %cst_13 [1] : vector<8x8xf32> to vector<8xf32>
    %20 = vector.shape_cast %19 : vector<8xf32> to vector<8x1xf32>
    %cst_14 = arith.constant dense<0.000000e+00> : vector<8x8xf32>
    %21 = tpu.matmul %18, %10, %cst_14 {dimension_numbers = #tpu.dot_dimension_numbers<[1], [0], [0], [1], [0, 0, 1, 1], [], []>} : vector<8x8xf32>, vector<8x8xf32>, vector<8x8xf32> -> vector<8x8xf32>
    %22 = tpu.reciprocal %20 : vector<8x1xf32> -> vector<8x1xf32>
    %23 = vector.broadcast %22 : vector<8x1xf32> to vector<8x8xf32>
    %24 = arith.mulf %21, %23 : vector<8x8xf32>
    %25 = vector.extract_strided_slice %6 {offsets = [0, 0], sizes = [32, 8], strides = [1, 1]} : vector<32x32xf32> to vector<32x8xf32>
    %cst_15 = arith.constant dense<0.000000e+00> : vector<8x32xf32>
    %26 = tpu.matmul %24, %25, %cst_15 {dimension_numbers = #tpu.dot_dimension_numbers<[1], [1], [0], [0], [0, 0, 1, 0], [], []>} : vector<8x8xf32>, vector<32x8xf32>, vector<8x32xf32> -> vector<8x32xf32>
    %27 = arith.addf %7, %26 : vector<8x32xf32>
    %28 = vector.extract_strided_slice %1 {offsets = [0, 8], sizes = [8, 8], strides = [1, 1]} : vector<8x32xf32> to vector<8x8xf32>
    %29 = vector.extract_strided_slice %3 {offsets = [0, 8], sizes = [8, 8], strides = [1, 1]} : vector<8x32xf32> to vector<8x8xf32>
    %30 = vector.extract_strided_slice %5 {offsets = [0, 8], sizes = [8, 8], strides = [1, 1]} : vector<8x32xf32> to vector<8x8xf32>
    %cst_16 = arith.constant dense<0.000000e+00> : vector<8x8xf32>
    %31 = tpu.matmul %28, %29, %cst_16 {dimension_numbers = #tpu.dot_dimension_numbers<[1], [1], [0], [0], [0, 0, 1, 0], [], []>} : vector<8x8xf32>, vector<8x8xf32>, vector<8x8xf32> -> vector<8x8xf32>
    %cst_17 = arith.constant 0.353553385 : f32
    %32 = vector.broadcast %cst_17 : f32 to vector<8x8xf32>
    %33 = arith.mulf %31, %32 : vector<8x8xf32>
    %cst_18 = arith.constant dense<0xFF800000> : vector<8xf32>
    %34 = vector.multi_reduction <maximumf>, %33, %cst_18 [1] : vector<8x8xf32> to vector<8xf32>
    %35 = vector.shape_cast %34 : vector<8xf32> to vector<8x1xf32>
    %36 = vector.broadcast %35 : vector<8x1xf32> to vector<8x8xf32>
    %37 = arith.subf %33, %36 : vector<8x8xf32>
    %38 = math.exp %37 : vector<8x8xf32>
    %cst_19 = arith.constant dense<0.000000e+00> : vector<8xf32>
    %39 = vector.multi_reduction <add>, %38, %cst_19 [1] : vector<8x8xf32> to vector<8xf32>
    %40 = vector.shape_cast %39 : vector<8xf32> to vector<8x1xf32>
    %cst_20 = arith.constant dense<0.000000e+00> : vector<8x8xf32>
    %41 = tpu.matmul %38, %30, %cst_20 {dimension_numbers = #tpu.dot_dimension_numbers<[1], [0], [0], [1], [0, 0, 1, 1], [], []>} : vector<8x8xf32>, vector<8x8xf32>, vector<8x8xf32> -> vector<8x8xf32>
    %42 = tpu.reciprocal %40 : vector<8x1xf32> -> vector<8x1xf32>
    %43 = vector.broadcast %42 : vector<8x1xf32> to vector<8x8xf32>
    %44 = arith.mulf %41, %43 : vector<8x8xf32>
    %45 = vector.extract_strided_slice %6 {offsets = [0, 8], sizes = [32, 8], strides = [1, 1]} : vector<32x32xf32> to vector<32x8xf32>
    %cst_21 = arith.constant dense<0.000000e+00> : vector<8x32xf32>
    %46 = tpu.matmul %44, %45, %cst_21 {dimension_numbers = #tpu.dot_dimension_numbers<[1], [1], [0], [0], [0, 0, 1, 0], [], []>} : vector<8x8xf32>, vector<32x8xf32>, vector<8x32xf32> -> vector<8x32xf32>
    %47 = arith.addf %27, %46 : vector<8x32xf32>
    %48 = vector.extract_strided_slice %1 {offsets = [0, 16], sizes = [8, 8], strides = [1, 1]} : vector<8x32xf32> to vector<8x8xf32>
    %49 = vector.extract_strided_slice %3 {offsets = [0, 16], sizes = [8, 8], strides = [1, 1]} : vector<8x32xf32> to vector<8x8xf32>
    %50 = vector.extract_strided_slice %5 {offsets = [0, 16], sizes = [8, 8], strides = [1, 1]} : vector<8x32xf32> to vector<8x8xf32>
    %cst_22 = arith.constant dense<0.000000e+00> : vector<8x8xf32>
    %51 = tpu.matmul %48, %49, %cst_22 {dimension_numbers = #tpu.dot_dimension_numbers<[1], [1], [0], [0], [0, 0, 1, 0], [], []>} : vector<8x8xf32>, vector<8x8xf32>, vector<8x8xf32> -> vector<8x8xf32>
    %cst_23 = arith.constant 0.353553385 : f32
    %52 = vector.broadcast %cst_23 : f32 to vector<8x8xf32>
    %53 = arith.mulf %51, %52 : vector<8x8xf32>
    %cst_24 = arith.constant dense<0xFF800000> : vector<8xf32>
    %54 = vector.multi_reduction <maximumf>, %53, %cst_24 [1] : vector<8x8xf32> to vector<8xf32>
    %55 = vector.shape_cast %54 : vector<8xf32> to vector<8x1xf32>
    %56 = vector.broadcast %55 : vector<8x1xf32> to vector<8x8xf32>
    %57 = arith.subf %53, %56 : vector<8x8xf32>
    %58 = math.exp %57 : vector<8x8xf32>
    %cst_25 = arith.constant dense<0.000000e+00> : vector<8xf32>
    %59 = vector.multi_reduction <add>, %58, %cst_25 [1] : vector<8x8xf32> to vector<8xf32>
    %60 = vector.shape_cast %59 : vector<8xf32> to vector<8x1xf32>
    %cst_26 = arith.constant dense<0.000000e+00> : vector<8x8xf32>
    %61 = tpu.matmul %58, %50, %cst_26 {dimension_numbers = #tpu.dot_dimension_numbers<[1], [0], [0], [1], [0, 0, 1, 1], [], []>} : vector<8x8xf32>, vector<8x8xf32>, vector<8x8xf32> -> vector<8x8xf32>
    %62 = tpu.reciprocal %60 : vector<8x1xf32> -> vector<8x1xf32>
    %63 = vector.broadcast %62 : vector<8x1xf32> to vector<8x8xf32>
    %64 = arith.mulf %61, %63 : vector<8x8xf32>
    %65 = vector.extract_strided_slice %6 {offsets = [0, 16], sizes = [32, 8], strides = [1, 1]} : vector<32x32xf32> to vector<32x8xf32>
    %cst_27 = arith.constant dense<0.000000e+00> : vector<8x32xf32>
    %66 = tpu.matmul %64, %65, %cst_27 {dimension_numbers = #tpu.dot_dimension_numbers<[1], [1], [0], [0], [0, 0, 1, 0], [], []>} : vector<8x8xf32>, vector<32x8xf32>, vector<8x32xf32> -> vector<8x32xf32>
    %67 = arith.addf %47, %66 : vector<8x32xf32>
    %68 = vector.extract_strided_slice %1 {offsets = [0, 24], sizes = [8, 8], strides = [1, 1]} : vector<8x32xf32> to vector<8x8xf32>
    %69 = vector.extract_strided_slice %3 {offsets = [0, 24], sizes = [8, 8], strides = [1, 1]} : vector<8x32xf32> to vector<8x8xf32>
    %70 = vector.extract_strided_slice %5 {offsets = [0, 24], sizes = [8, 8], strides = [1, 1]} : vector<8x32xf32> to vector<8x8xf32>
    %cst_28 = arith.constant dense<0.000000e+00> : vector<8x8xf32>
    %71 = tpu.matmul %68, %69, %cst_28 {dimension_numbers = #tpu.dot_dimension_numbers<[1], [1], [0], [0], [0, 0, 1, 0], [], []>} : vector<8x8xf32>, vector<8x8xf32>, vector<8x8xf32> -> vector<8x8xf32>
    %cst_29 = arith.constant 0.353553385 : f32
    %72 = vector.broadcast %cst_29 : f32 to vector<8x8xf32>
    %73 = arith.mulf %71, %72 : vector<8x8xf32>
    %cst_30 = arith.constant dense<0xFF800000> : vector<8xf32>
    %74 = vector.multi_reduction <maximumf>, %73, %cst_30 [1] : vector<8x8xf32> to vector<8xf32>
    %75 = vector.shape_cast %74 : vector<8xf32> to vector<8x1xf32>
    %76 = vector.broadcast %75 : vector<8x1xf32> to vector<8x8xf32>
    %77 = arith.subf %73, %76 : vector<8x8xf32>
    %78 = math.exp %77 : vector<8x8xf32>
    %cst_31 = arith.constant dense<0.000000e+00> : vector<8xf32>
    %79 = vector.multi_reduction <add>, %78, %cst_31 [1] : vector<8x8xf32> to vector<8xf32>
    %80 = vector.shape_cast %79 : vector<8xf32> to vector<8x1xf32>
    %cst_32 = arith.constant dense<0.000000e+00> : vector<8x8xf32>
    %81 = tpu.matmul %78, %70, %cst_32 {dimension_numbers = #tpu.dot_dimension_numbers<[1], [0], [0], [1], [0, 0, 1, 1], [], []>} : vector<8x8xf32>, vector<8x8xf32>, vector<8x8xf32> -> vector<8x8xf32>
    %82 = tpu.reciprocal %80 : vector<8x1xf32> -> vector<8x1xf32>
    %83 = vector.broadcast %82 : vector<8x1xf32> to vector<8x8xf32>
    %84 = arith.mulf %81, %83 : vector<8x8xf32>
    %85 = vector.extract_strided_slice %6 {offsets = [0, 24], sizes = [32, 8], strides = [1, 1]} : vector<32x32xf32> to vector<32x8xf32>
    %cst_33 = arith.constant dense<0.000000e+00> : vector<8x32xf32>
    %86 = tpu.matmul %84, %85, %cst_33 {dimension_numbers = #tpu.dot_dimension_numbers<[1], [1], [0], [0], [0, 0, 1, 0], [], []>} : vector<8x8xf32>, vector<32x8xf32>, vector<8x32xf32> -> vector<8x32xf32>
    %87 = arith.addf %67, %86 : vector<8x32xf32>
    %c0_34 = arith.constant 0 : index
    %c0_35 = arith.constant 0 : index
    %88 = vector.load %arg5[%c0_34, %c0_35] : memref<1x32xf32, #tpu.memory_space<vmem>>, vector<1x32xf32>
    %89 = vector.broadcast %88 : vector<1x32xf32> to vector<8x32xf32>
    %90 = arith.addf %87, %89 : vector<8x32xf32>
    %c0_36 = arith.constant 0 : index
    %c0_37 = arith.constant 0 : index
    %c0_38 = arith.constant 0 : index
    %91 = vector.load %arg6[%c0_36, %c0_37, %c0_38] : memref<1x8x32xf32, #tpu.memory_space<vmem>>, vector<1x8x32xf32>
    %92 = vector.shape_cast %91 : vector<1x8x32xf32> to vector<8x32xf32>
    %93 = vector.shape_cast %90 : vector<8x32xf32> to vector<1x8x32xf32>
    tpu.vector_store %arg6[%c0_36, %c0_37, %c0_38], %93 {strides = array<i32>} : memref<1x8x32xf32, #tpu.memory_space<vmem>>, vector<1x8x32xf32>,
    return
  }
  func.func @transform_0(%arg0: i32) -> (i32, i32, i32) {
    %c0_i32 = arith.constant 0 : i32
    %c0_i32_0 = arith.constant 0 : i32
    %c0_i32_1 = arith.constant 0 : i32
    return %arg0, %c0_i32, %c0_i32_0 : i32, i32, i32
  }
  func.func @transform_1(%arg0: i32) -> (i32, i32, i32) {
    %c0_i32 = arith.constant 0 : i32
    %c0_i32_0 = arith.constant 0 : i32
    %c0_i32_1 = arith.constant 0 : i32
    return %arg0, %c0_i32, %c0_i32_0 : i32, i32, i32
  }
  func.func @transform_2(%arg0: i32) -> (i32, i32, i32) {
    %c0_i32 = arith.constant 0 : i32
    %c0_i32_0 = arith.constant 0 : i32
    %c0_i32_1 = arith.constant 0 : i32
    return %arg0, %c0_i32, %c0_i32_0 : i32, i32, i32
  }
  func.func @transform_3(%arg0: i32) -> (i32, i32) {
    %c0_i32 = arith.constant 0 : i32
    %c0_i32_0 = arith.constant 0 : i32
    %c0_i32_1 = arith.constant 0 : i32
    return %c0_i32, %c0_i32_0 : i32, i32
  }
  func.func @transform_4(%arg0: i32) -> (i32, i32) {
    %c0_i32 = arith.constant 0 : i32
    %c0_i32_0 = arith.constant 0 : i32
    %c0_i32_1 = arith.constant 0 : i32
    return %c0_i32, %c0_i32_0 : i32, i32
  }
  func.func @transform_5(%arg0: i32) -> (i32, i32, i32) {
    %c0_i32 = arith.constant 0 : i32
    %c0_i32_0 = arith.constant 0 : i32
    %c0_i32_1 = arith.constant 0 : i32
    return %arg0, %c0_i32, %c0_i32_0 : i32, i32, i32
  }
}

module attributes {stable_mosaic.version = 11 : i64} {
  func.func @_qkv_proj_kernel(%arg0: i32, %arg1: memref<16x32xf32, #tpu.memory_space<vmem>>, %arg2: memref<16x32xf32, #tpu.memory_space<vmem>>, %arg3: memref<16x32xf32, #tpu.memory_space<vmem>>, %arg4: memref<32x32xf32, #tpu.memory_space<vmem>>, %arg5: memref<32x32xf32, #tpu.memory_space<vmem>>, %arg6: memref<32x32xf32, #tpu.memory_space<vmem>>, %arg7: memref<1x32xf32, #tpu.memory_space<vmem>>, %arg8: memref<1x32xf32, #tpu.memory_space<vmem>>, %arg9: memref<1x32xf32, #tpu.memory_space<vmem>>, %arg10: memref<16x32xf32, #tpu.memory_space<vmem>>, %arg11: memref<16x32xf32, #tpu.memory_space<vmem>>, %arg12: memref<16x32xf32, #tpu.memory_space<vmem>>) attributes {dimension_semantics = [#tpu.dimension_semantics<parallel>], iteration_bounds = array<i64: 1>, scalar_prefetch = 0 : i64, scratch_operands = 0 : i64, tpu.core_type = #tpu.core_type<tc>, window_params = [{transform_indices = @transform_0, window_bounds = array<i64: 16, 32>}, {transform_indices = @transform_1, window_bounds = array<i64: 16, 32>}, {transform_indices = @transform_2, window_bounds = array<i64: 16, 32>}, {pipeline_mode = #tpu.pipeline_mode<synchronous>, transform_indices = @transform_3, window_bounds = array<i64: 32, 32>}, {pipeline_mode = #tpu.pipeline_mode<synchronous>, transform_indices = @transform_4, window_bounds = array<i64: 32, 32>}, {pipeline_mode = #tpu.pipeline_mode<synchronous>, transform_indices = @transform_5, window_bounds = array<i64: 32, 32>}, {pipeline_mode = #tpu.pipeline_mode<synchronous>, transform_indices = @transform_6, window_bounds = array<i64: 1, 32>}, {pipeline_mode = #tpu.pipeline_mode<synchronous>, transform_indices = @transform_7, window_bounds = array<i64: 1, 32>}, {pipeline_mode = #tpu.pipeline_mode<synchronous>, transform_indices = @transform_8, window_bounds = array<i64: 1, 32>}, {transform_indices = @transform_9, window_bounds = array<i64: 16, 32>}, {transform_indices = @transform_10, window_bounds = array<i64: 16, 32>}, {transform_indices = @transform_11, window_bounds = array<i64: 16, 32>}]} {
    %c0 = arith.constant 0 : index
    %c0_0 = arith.constant 0 : index
    %0 = vector.load %arg1[%c0, %c0_0] : memref<16x32xf32, #tpu.memory_space<vmem>>, vector<16x32xf32>
    %c0_1 = arith.constant 0 : index
    %c0_2 = arith.constant 0 : index
    %1 = vector.load %arg4[%c0_1, %c0_2] : memref<32x32xf32, #tpu.memory_space<vmem>>, vector<32x32xf32>
    %cst = arith.constant dense<0.000000e+00> : vector<16x32xf32>
    %2 = tpu.matmul %0, %1, %cst {dimension_numbers = #tpu.dot_dimension_numbers<[1], [1], [0], [0], [0, 0, 1, 0], [], []>} : vector<16x32xf32>, vector<32x32xf32>, vector<16x32xf32> -> vector<16x32xf32>
    %c0_3 = arith.constant 0 : index
    %c0_4 = arith.constant 0 : index
    %3 = vector.load %arg7[%c0_3, %c0_4] : memref<1x32xf32, #tpu.memory_space<vmem>>, vector<1x32xf32>
    %4 = vector.broadcast %3 : vector<1x32xf32> to vector<16x32xf32>
    %5 = arith.addf %2, %4 : vector<16x32xf32>
    %c0_5 = arith.constant 0 : index
    %c0_6 = arith.constant 0 : index
    %6 = vector.load %arg10[%c0_5, %c0_6] : memref<16x32xf32, #tpu.memory_space<vmem>>, vector<16x32xf32>
    tpu.vector_store %arg10[%c0_5, %c0_6], %5 {strides = array<i32>} : memref<16x32xf32, #tpu.memory_space<vmem>>, vector<16x32xf32>,
    %c0_7 = arith.constant 0 : index
    %c0_8 = arith.constant 0 : index
    %7 = vector.load %arg2[%c0_7, %c0_8] : memref<16x32xf32, #tpu.memory_space<vmem>>, vector<16x32xf32>
    %c0_9 = arith.constant 0 : index
    %c0_10 = arith.constant 0 : index
    %8 = vector.load %arg5[%c0_9, %c0_10] : memref<32x32xf32, #tpu.memory_space<vmem>>, vector<32x32xf32>
    %cst_11 = arith.constant dense<0.000000e+00> : vector<16x32xf32>
    %9 = tpu.matmul %7, %8, %cst_11 {dimension_numbers = #tpu.dot_dimension_numbers<[1], [1], [0], [0], [0, 0, 1, 0], [], []>} : vector<16x32xf32>, vector<32x32xf32>, vector<16x32xf32> -> vector<16x32xf32>
    %c0_12 = arith.constant 0 : index
    %c0_13 = arith.constant 0 : index
    %10 = vector.load %arg8[%c0_12, %c0_13] : memref<1x32xf32, #tpu.memory_space<vmem>>, vector<1x32xf32>
    %11 = vector.broadcast %10 : vector<1x32xf32> to vector<16x32xf32>
    %12 = arith.addf %9, %11 : vector<16x32xf32>
    %c0_14 = arith.constant 0 : index
    %c0_15 = arith.constant 0 : index
    %13 = vector.load %arg11[%c0_14, %c0_15] : memref<16x32xf32, #tpu.memory_space<vmem>>, vector<16x32xf32>
    tpu.vector_store %arg11[%c0_14, %c0_15], %12 {strides = array<i32>} : memref<16x32xf32, #tpu.memory_space<vmem>>, vector<16x32xf32>,
    %c0_16 = arith.constant 0 : index
    %c0_17 = arith.constant 0 : index
    %14 = vector.load %arg3[%c0_16, %c0_17] : memref<16x32xf32, #tpu.memory_space<vmem>>, vector<16x32xf32>
    %c0_18 = arith.constant 0 : index
    %c0_19 = arith.constant 0 : index
    %15 = vector.load %arg6[%c0_18, %c0_19] : memref<32x32xf32, #tpu.memory_space<vmem>>, vector<32x32xf32>
    %cst_20 = arith.constant dense<0.000000e+00> : vector<16x32xf32>
    %16 = tpu.matmul %14, %15, %cst_20 {dimension_numbers = #tpu.dot_dimension_numbers<[1], [1], [0], [0], [0, 0, 1, 0], [], []>} : vector<16x32xf32>, vector<32x32xf32>, vector<16x32xf32> -> vector<16x32xf32>
    %c0_21 = arith.constant 0 : index
    %c0_22 = arith.constant 0 : index
    %17 = vector.load %arg9[%c0_21, %c0_22] : memref<1x32xf32, #tpu.memory_space<vmem>>, vector<1x32xf32>
    %18 = vector.broadcast %17 : vector<1x32xf32> to vector<16x32xf32>
    %19 = arith.addf %16, %18 : vector<16x32xf32>
    %c0_23 = arith.constant 0 : index
    %c0_24 = arith.constant 0 : index
    %20 = vector.load %arg12[%c0_23, %c0_24] : memref<16x32xf32, #tpu.memory_space<vmem>>, vector<16x32xf32>
    tpu.vector_store %arg12[%c0_23, %c0_24], %19 {strides = array<i32>} : memref<16x32xf32, #tpu.memory_space<vmem>>, vector<16x32xf32>,
    return
  }
  func.func @transform_0(%arg0: i32) -> (i32, i32) {
    %c0_i32 = arith.constant 0 : i32
    %c0_i32_0 = arith.constant 0 : i32
    return %arg0, %c0_i32 : i32, i32
  }
  func.func @transform_1(%arg0: i32) -> (i32, i32) {
    %c0_i32 = arith.constant 0 : i32
    %c0_i32_0 = arith.constant 0 : i32
    return %arg0, %c0_i32 : i32, i32
  }
  func.func @transform_2(%arg0: i32) -> (i32, i32) {
    %c0_i32 = arith.constant 0 : i32
    %c0_i32_0 = arith.constant 0 : i32
    return %arg0, %c0_i32 : i32, i32
  }
  func.func @transform_3(%arg0: i32) -> (i32, i32) {
    %c0_i32 = arith.constant 0 : i32
    %c0_i32_0 = arith.constant 0 : i32
    %c0_i32_1 = arith.constant 0 : i32
    return %c0_i32, %c0_i32_0 : i32, i32
  }
  func.func @transform_4(%arg0: i32) -> (i32, i32) {
    %c0_i32 = arith.constant 0 : i32
    %c0_i32_0 = arith.constant 0 : i32
    %c0_i32_1 = arith.constant 0 : i32
    return %c0_i32, %c0_i32_0 : i32, i32
  }
  func.func @transform_5(%arg0: i32) -> (i32, i32) {
    %c0_i32 = arith.constant 0 : i32
    %c0_i32_0 = arith.constant 0 : i32
    %c0_i32_1 = arith.constant 0 : i32
    return %c0_i32, %c0_i32_0 : i32, i32
  }
  func.func @transform_6(%arg0: i32) -> (i32, i32) {
    %c0_i32 = arith.constant 0 : i32
    %c0_i32_0 = arith.constant 0 : i32
    %c0_i32_1 = arith.constant 0 : i32
    return %c0_i32, %c0_i32_0 : i32, i32
  }
  func.func @transform_7(%arg0: i32) -> (i32, i32) {
    %c0_i32 = arith.constant 0 : i32
    %c0_i32_0 = arith.constant 0 : i32
    %c0_i32_1 = arith.constant 0 : i32
    return %c0_i32, %c0_i32_0 : i32, i32
  }
  func.func @transform_8(%arg0: i32) -> (i32, i32) {
    %c0_i32 = arith.constant 0 : i32
    %c0_i32_0 = arith.constant 0 : i32
    %c0_i32_1 = arith.constant 0 : i32
    return %c0_i32, %c0_i32_0 : i32, i32
  }
  func.func @transform_9(%arg0: i32) -> (i32, i32) {
    %c0_i32 = arith.constant 0 : i32
    %c0_i32_0 = arith.constant 0 : i32
    return %arg0, %c0_i32 : i32, i32
  }
  func.func @transform_10(%arg0: i32) -> (i32, i32) {
    %c0_i32 = arith.constant 0 : i32
    %c0_i32_0 = arith.constant 0 : i32
    return %arg0, %c0_i32 : i32, i32
  }
  func.func @transform_11(%arg0: i32) -> (i32, i32) {
    %c0_i32 = arith.constant 0 : i32
    %c0_i32_0 = arith.constant 0 : i32
    return %arg0, %c0_i32 : i32, i32
  }
}

</mosaic_0001>

<llo_original>
// kernel: attention_forward.3
$region0: #{attention_forward.3}
  #allocation0 [shape = 'u32[]', space=smem, size = 0x4, offset = 0x4, fixed_abs, tag = 'smem constant byte address 0x4 - core index']
  #allocation1 [shape = 'u32[72,128]{1,0:T(1,128)}', space=vmem, size = 0x9000, scoped, tag = 'internal scratch']
  %s0 = inlined_call_operand.vmem [shape: f32[2,8,32], index: 0, kind: input, shape index: {}]
  %s1 = inlined_call_operand.vmem [shape: f32[2,8,32], index: 1, kind: input, shape index: {}]
  %s2 = inlined_call_operand.vmem [shape: f32[2,8,32], index: 2, kind: input, shape index: {}]
  %s3 = inlined_call_operand.hbm [shape: f32[32,32], index: 3, kind: input, shape index: {}]
  %s4 = inlined_call_operand.vmem [shape: f32[1,32], index: 4, kind: input, shape index: {}]
  %s5 = inlined_call_operand.hbm [shape: f32[2,8,32], index: 5, kind: output, shape index: {}]
  %s6 = sld [smem:[#allocation0]]
  $region57: #{attention_forward.3} parent=0
    _
  %s8 = ssub.s32 1, %s6
  %s9 = scalar_select 0, %s8, %s6
  $region1: #{attention_forward.3} parent=0
    #allocation2 [shape = 'u8[16384]{0}', space=vmem, size = 0x4000, scoped, tag = 'input window, operand 3, single buffered']
    #allocation3 [shape = 's32[2]{0}', space=sflag, size = 0x8, scoped, tag = 'scoped memory for attention_forward.3']
    #allocation4 [shape = 's32[2]{0}', space=sflag, size = 0x8, scoped, tag = 'scoped memory for attention_forward.3']
    #allocation5 [shape = 'u8[8192]{0}', space=vmem, size = 0x2000, scoped, tag = 'output window, operand 0']
    %10 = vsyncpa [#allocation3], 0
    %11 = vsyncpa [#allocation4], 0
    %s12 = scalar_lea.sflag [#allocation4], 1
    %13 = vsyncpa %s12, 0
    loop: start=0, step=1, limit=4
    $region2: #{attention_forward.3} parent=1 // loop_pre_header
      _
    $region3: #{attention_forward.3} parent=1 // loop_header
      %s15 = sphi 0, %s19
      %p16 = scmp.ge.s32.totalorder %s15, 4
      %s25 = sphi 0, %s27
      %s28 = sphi 0, %s25
      %s29 = sphi 0, %s28
      %s45 = sphi 0, %s29
      %s51 = sphi 0, %s53
      %s54 = sphi 0, %s51
      %s55 = sphi 0, %s54
      %s71 = sphi 0, %s55
      %s77 = sphi 0, %s79
      %s80 = sphi 0, %s77
      %s81 = sphi 0, %s80
      %s97 = sphi 0, %s81
      %s101 = sphi 0, %s101
      %s103 = sphi 0, %s101
      %s104 = sphi 0, %s103
      %s118 = sphi 0, %s104
      %s122 = sphi 0, %s122
      %s124 = sphi 0, %s122
      %s125 = sphi 0, %s124
      %s139 = sphi 0, %s125
      %s145 = sphi 0, %s147
      %s148 = sphi 0, %s145
      %s149 = sphi 0, %s148
      %s165 = sphi 0, %s149
    $region4: #{attention_forward.3} parent=1 // loop_header_branch
      %18 = sbr.rel (%p16) target = $region8
    $region5: #{attention_forward.3} parent=1 // loop_body
      %s20 = ssub.s32 %s15, 1
      %s21 = ssub.s32 %s15, 2
      %s22 = sadd.s32 %s15, 1
      %s23 = ssub.s32 %s15, %s22
      %p24 = scmp.eq.s32.totalorder %s23, 0
      %s26 = sadd.s32 %s25, 1
      %s27 = scalar_select %p24, %s25, %s26
      %p30 = pneg %p24
      %p31 = scmp.eq.s32.totalorder %s15, 1
      %p32 = por %p30, %p31
      %p33 = scmp.ne.s32.totalorder %s25, %s28
      %p34 = scmp.eq.s32.totalorder %s15, 0
      %p35 = por %p33, %p34
      %p36 = scmp.ne.s32.totalorder %s25, %s28
      %p37 = scmp.eq.s32.totalorder %s20, 1
      %p38 = por %p36, %p37
      %p39 = scmp.ne.s32.totalorder %s28, %s29
      %p40 = scmp.eq.s32.totalorder %s20, 0
      %p41 = por %p39, %p40
      %p42 = scmp.ne.s32.totalorder %s28, %s29
      %p43 = scmp.eq.s32.totalorder %s21, 1
      %p44 = por %p42, %p43
      %p46 = scmp.ne.s32.totalorder %s29, %s45
      %p47 = scmp.eq.s32.totalorder %s21, 0
      %p48 = por %p46, %p47
      %s49 = ssub.s32 %s15, %s22
      %p50 = scmp.eq.s32.totalorder %s49, 0
      %s52 = sadd.s32 %s51, 1
      %s53 = scalar_select %p50, %s51, %s52
      %p56 = pneg %p50
      %p57 = scmp.eq.s32.totalorder %s15, 1
      %p58 = por %p56, %p57
      %p59 = scmp.ne.s32.totalorder %s51, %s54
      %p60 = scmp.eq.s32.totalorder %s15, 0
      %p61 = por %p59, %p60
      %p62 = scmp.ne.s32.totalorder %s51, %s54
      %p63 = scmp.eq.s32.totalorder %s20, 1
      %p64 = por %p62, %p63
      %p65 = scmp.ne.s32.totalorder %s54, %s55
      %p66 = scmp.eq.s32.totalorder %s20, 0
      %p67 = por %p65, %p66
      %p68 = scmp.ne.s32.totalorder %s54, %s55
      %p69 = scmp.eq.s32.totalorder %s21, 1
      %p70 = por %p68, %p69
      %p72 = scmp.ne.s32.totalorder %s55, %s71
      %p73 = scmp.eq.s32.totalorder %s21, 0
      %p74 = por %p72, %p73
      %s75 = ssub.s32 %s15, %s22
      %p76 = scmp.eq.s32.totalorder %s75, 0
      %s78 = sadd.s32 %s77, 1
      %s79 = scalar_select %p76, %s77, %s78
      %p82 = pneg %p76
      %p83 = scmp.eq.s32.totalorder %s15, 1
      %p84 = por %p82, %p83
      %p85 = scmp.ne.s32.totalorder %s77, %s80
      %p86 = scmp.eq.s32.totalorder %s15, 0
      %p87 = por %p85, %p86
      %p88 = scmp.ne.s32.totalorder %s77, %s80
      %p89 = scmp.eq.s32.totalorder %s20, 1
      %p90 = por %p88, %p89
      %p91 = scmp.ne.s32.totalorder %s80, %s81
      %p92 = scmp.eq.s32.totalorder %s20, 0
      %p93 = por %p91, %p92
      %p94 = scmp.ne.s32.totalorder %s80, %s81
      %p95 = scmp.eq.s32.totalorder %s21, 1
      %p96 = por %p94, %p95
      %p98 = scmp.ne.s32.totalorder %s81, %s97
      %p99 = scmp.eq.s32.totalorder %s21, 0
      %p100 = por %p98, %p99
      %s102 = sadd.s32 %s101, 1
      %p105 = scmp.eq.s32.totalorder %s15, 1
      %p106 = scmp.ne.s32.totalorder %s101, %s103
      %p107 = scmp.eq.s32.totalorder %s15, 0
      %p108 = por %p106, %p107
      %p109 = scmp.ne.s32.totalorder %s101, %s103
      %p110 = scmp.eq.s32.totalorder %s20, 1
      %p111 = por %p109, %p110
      %p112 = scmp.ne.s32.totalorder %s103, %s104
      %p113 = scmp.eq.s32.totalorder %s20, 0
      %p114 = por %p112, %p113
      %p115 = scmp.ne.s32.totalorder %s103, %s104
      %p116 = scmp.eq.s32.totalorder %s21, 1
      %p117 = por %p115, %p116
      %p119 = scmp.ne.s32.totalorder %s104, %s118
      %p120 = scmp.eq.s32.totalorder %s21, 0
      %p121 = por %p119, %p120
      %s123 = sadd.s32 %s122, 1
      %p126 = scmp.eq.s32.totalorder %s15, 1
      %p127 = scmp.ne.s32.totalorder %s122, %s124
      %p128 = scmp.eq.s32.totalorder %s15, 0
      %p129 = por %p127, %p128
      %p130 = scmp.ne.s32.totalorder %s122, %s124
      %p131 = scmp.eq.s32.totalorder %s20, 1
      %p132 = por %p130, %p131
      %p133 = scmp.ne.s32.totalorder %s124, %s125
      %p134 = scmp.eq.s32.totalorder %s20, 0
      %p135 = por %p133, %p134
      %p136 = scmp.ne.s32.totalorder %s124, %s125
      %p137 = scmp.eq.s32.totalorder %s21, 1
      %p138 = por %p136, %p137
      %p140 = scmp.ne.s32.totalorder %s125, %s139
      %p141 = scmp.eq.s32.totalorder %s21, 0
      %p142 = por %p140, %p141
      %s143 = ssub.s32 %s15, %s22
      %p144 = scmp.eq.s32.totalorder %s143, 0
      %s146 = sadd.s32 %s145, 1
      %s147 = scalar_select %p144, %s145, %s146
      %p150 = pneg %p144
      %p151 = scmp.eq.s32.totalorder %s15, 1
      %p152 = por %p150, %p151
      %p153 = scmp.ne.s32.totalorder %s145, %s148
      %p154 = scmp.eq.s32.totalorder %s15, 0
      %p155 = por %p153, %p154
      %p156 = scmp.ne.s32.totalorder %s145, %s148
      %p157 = scmp.eq.s32.totalorder %s20, 1
      %p158 = por %p156, %p157
      %p159 = scmp.ne.s32.totalorder %s148, %s149
      %p160 = scmp.eq.s32.totalorder %s20, 0
      %p161 = por %p159, %p160
      %p162 = scmp.ne.s32.totalorder %s148, %s149
      %p163 = scmp.eq.s32.totalorder %s21, 1
      %p164 = por %p162, %p163
      %p166 = scmp.ne.s32.totalorder %s149, %s165
      %p167 = scmp.eq.s32.totalorder %s21, 0
      %p168 = por %p166, %p167
      %p169 = scmp.le.s32.totalorder 1, %s15
      %p170 = scmp.lt.s32.totalorder %s15, 3
      %p171 = pnand %p169, %p170
      %p172 = pneg %p171
      // Predicated region
      $region9: #{attention_forward.3} parent=5 // pred_check
        _
      $region10: #{attention_forward.3} parent=5 // pred_check_branch
        %174 = sbr.rel (%p171) target = $region12
      $region11: #{attention_forward.3} parent=5 // pred_region
        %s175 = ssub.s32 %s15, 1
        // Predicated region
        $region13: #{attention_forward.3} parent=11 // pred_check
          %p176 = pneg %p114
        $region14: #{attention_forward.3} parent=11 // pred_check_branch
          %178 = sbr.rel (%p176) target = $region16
        $region15: #{attention_forward.3} parent=11 // pred_region
          %180 = vsyncadd [#allocation3], 0
          %s181 = sshll.u32 %s3, 4
          %s182 = int_to_ptr.hbm [resolvable:$true] %s181
          %s183 = sshll.u32 [#allocation2], 4
          %s184 = int_to_ptr.vmem [resolvable:$true] %s183
          %189 = dma.hbm_to_vmem [thread:$0]  %s182, 512, %s184, [#allocation3], 128, 128, 8
        $region16: #{attention_forward.3} parent=11 // pred_fallthru
          _
        // Predicated region
        $region17: #{attention_forward.3} parent=11 // pred_check
          %p190 = pneg %p135
        $region18: #{attention_forward.3} parent=11 // pred_check_branch
          %192 = sbr.rel (%p190) target = $region20
        $region19: #{attention_forward.3} parent=11 // pred_region
          _
        $region20: #{attention_forward.3} parent=11 // pred_fallthru
          _
      $region12: #{attention_forward.3} parent=5 // pred_fallthru
        _
      %p193 = scmp.lt.s32.totalorder %s15, 2
      // Predicated region
      $region21: #{attention_forward.3} parent=5 // pred_check
        %p194 = pneg %p193
      $region22: #{attention_forward.3} parent=5 // pred_check_branch
        %196 = sbr.rel (%p194) target = $region24
      $region23: #{attention_forward.3} parent=5 // pred_region
        // Predicated region
        $region25: #{attention_forward.3} parent=23 // pred_check
          %p197 = pneg %p35
        $region26: #{attention_forward.3} parent=23 // pred_check_branch
          %199 = sbr.rel (%p197) target = $region28
        $region27: #{attention_forward.3} parent=23 // pred_region
          %p200 = scmp.lt.s32.totalorder %s15, 1
          %s201 = scalar_select %p200, %s15, 1
          %s202 = smul.addr %s201, 8
          %s203 = scalar_lea.vmem %s0, %s202
        $region28: #{attention_forward.3} parent=23 // pred_fallthru
          _
        // Predicated region
        $region29: #{attention_forward.3} parent=23 // pred_check
          %p204 = pneg %p61
        $region30: #{attention_forward.3} parent=23 // pred_check_branch
          %206 = sbr.rel (%p204) target = $region32
        $region31: #{attention_forward.3} parent=23 // pred_region
          %p207 = scmp.lt.s32.totalorder %s15, 1
          %s208 = scalar_select %p207, %s15, 1
          %s209 = smul.addr %s208, 8
          %s210 = scalar_lea.vmem %s1, %s209
        $region32: #{attention_forward.3} parent=23 // pred_fallthru
          _
        // Predicated region
        $region33: #{attention_forward.3} parent=23 // pred_check
          %p211 = pneg %p87
        $region34: #{attention_forward.3} parent=23 // pred_check_branch
          %213 = sbr.rel (%p211) target = $region36
        $region35: #{attention_forward.3} parent=23 // pred_region
          %p214 = scmp.lt.s32.totalorder %s15, 1
          %s215 = scalar_select %p214, %s15, 1
          %s216 = smul.addr %s215, 8
          %s217 = scalar_lea.vmem %s2, %s216
        $region36: #{attention_forward.3} parent=23 // pred_fallthru
          _
      $region24: #{attention_forward.3} parent=5 // pred_fallthru
        _
      %p218 = scmp.le.s32.totalorder 1, %s15
      %p219 = scmp.lt.s32.totalorder %s15, 3
      %p220 = pnand %p218, %p219
      %p221 = pneg %p220
      // Predicated region
      $region37: #{attention_forward.3} parent=5 // pred_check
        _
      $region38: #{attention_forward.3} parent=5 // pred_check_branch
        %223 = sbr.rel (%p220) target = $region40
      $region39: #{attention_forward.3} parent=5 // pred_region
        %s224 = ssub.s32 %s15, 1
        // Predicated region
        $region41: #{attention_forward.3} parent=39 // pred_check
          %p225 = pneg %p114
        $region42: #{attention_forward.3} parent=39 // pred_check_branch
          %227 = sbr.rel (%p225) target = $region44
        $region43: #{attention_forward.3} parent=39 // pred_region
          %229 = dma.done [#allocation3], 512
        $region44: #{attention_forward.3} parent=39 // pred_fallthru
          _
        %p230 = scmp.lt.s32.totalorder %s20, 1
        %s231 = scalar_select %p230, %s20, 1
        %s232 = smul.addr %s231, 8
        %s233 = scalar_lea.vmem %s0, %s232
        %p234 = pneg %p41
        %p235 = pneg %p38
        %p236 = scmp.lt.s32.totalorder %s20, 1
        %s237 = scalar_select %p236, %s20, 1
        %s238 = smul.addr %s237, 8
        %s239 = scalar_lea.vmem %s1, %s238
        %p240 = pneg %p67
        %p241 = pneg %p64
        %p242 = scmp.lt.s32.totalorder %s20, 1
        %s243 = scalar_select %p242, %s20, 1
        %s244 = smul.addr %s243, 8
        %s245 = scalar_lea.vmem %s2, %s244
        %p246 = pneg %p93
        %p247 = pneg %p90
        %p248 = pneg %p114
        %p249 = pneg %p111
        %p250 = pneg %p135
        %p251 = pneg %p132
        %p252 = pneg %p161
        %p253 = pneg %p158
        %s254 = sand.u32 %s148, 1
        %s255 = scalar_lea.sflag [#allocation4], %s254
        %s256 = sand.u32 %s148, 1
        %s257 = smul.addr %s256, 8
        %s258 = scalar_lea.vmem [#allocation5], %s257
        %p259 = scmp.lt.s32.totalorder %s20, 1
        %s260 = scalar_select %p259, %s20, 1
        %s261 = smul.addr %s260, 8
        %s262 = scalar_lea.vmem %s0, %s261
        %p263 = scmp.lt.s32.totalorder %s20, 1
        %s264 = scalar_select %p263, %s20, 1
        %s265 = smul.addr %s264, 8
        %s266 = scalar_lea.vmem %s1, %s265
        %p267 = scmp.lt.s32.totalorder %s20, 1
        %s268 = scalar_select %p267, %s20, 1
        %s269 = smul.addr %s268, 8
        %s270 = scalar_lea.vmem %s2, %s269
        %v271 = vld [vmem:[%s262] sm:$0xff]
        %v272 = vld [vmem:[%s266] sm:$0xff]
        %v273 = vld [vmem:[%s270] sm:$0xff]
        %v274 = vld [vmem:[#allocation2] sm:$0xff]
        %v275 = vld [vmem:[#allocation2 + $0x8] sm:$0xff]
        %v276 = vld [vmem:[#allocation2 + $0x10] sm:$0xff]
        %v277 = vld [vmem:[#allocation2 + $0x18] sm:$0xff]
        %vm278 = vcmask 64512
        %v280 = vsel %vm278, %v271, 0
        %v283 = vsel %vm278, %v272, 0
        %285 = vmatpush.xpose.msra.mxu0 0.0
        %286 = vmatpush.xpose.msra.mxu0 0.0
        %287 = vmatpush.xpose.msra.mxu0 0.0
        %288 = vmatpush.xpose.msra.mxu0 0.0
        %289 = vmatpush.xpose.msra.mxu0 0.0
        %290 = vmatpush.xpose.msra.mxu0 0.0
        %291 = vmatpush.xpose.msra.mxu0 0.0
        %292 = vmatpush.xpose.msra.mxu0 0.0
        %293 = vmatpush.xpose.msra.mxu0 0.0
        %294 = vmatpush.xpose.msra.mxu0 0.0
        %295 = vmatpush.xpose.msra.mxu0 0.0
        %296 = vmatpush.xpose.msra.mxu0 0.0
        %297 = vmatpush.xpose.msra.mxu0 0.0
        %298 = vmatpush.xpose.msra.mxu0 0.0
        %299 = vmatpush.xpose.msra.mxu0 0.0
        %300 = vmatpush.xpose.msra.mxu0 %v283
        %301 = vmatmul.f32.gmra.mxu0 %v280
        %v302 = vpop.f32.mrf.mxu0
        %v303 = vadd.f32 0.0, %v302
        %304 = vdwg.mxu0
        %v305 = vmul.f32 %v303, 0.35355338
        %v306 = vsel %vm278, %v305, -inf
        %307 = vmax.xlane.f32.xlu0 %v306
        %v308 = vpop.xlane.xlu0 %307
        %v309 = vsub.f32 %v305, %v308
        %v310 = vmul.f32 %v309, 1.442695
        %v311 = vpow.pop %v310
        %v312 = vsel %vm278, %v311, 0.0
        %313 = vadd.xlane.f32.xlu0 %v312
        %v314 = vpop.xlane.xlu0 %313
        %v316 = vsel %vm278, %v311, 0
        %318 = vmatpush.msra.mxu0 0.0
        %319 = vmatpush.msra.mxu0 0.0
        %320 = vmatpush.msra.mxu0 0.0
        %321 = vmatpush.msra.mxu0 0.0
        %322 = vmatpush.msra.mxu0 0.0
        %323 = vmatpush.msra.mxu0 0.0
        %324 = vmatpush.msra.mxu0 0.0
        %325 = vmatpush.msra.mxu0 0.0
        %326 = vmatpush.msra.mxu0 0.0
        %327 = vmatpush.msra.mxu0 0.0
        %328 = vmatpush.msra.mxu0 0.0
        %329 = vmatpush.msra.mxu0 0.0
        %330 = vmatpush.msra.mxu0 0.0
        %331 = vmatpush.msra.mxu0 0.0
        %332 = vmatpush.msra.mxu0 0.0
        %333 = vmatpush.msra.mxu0 %v273
        %334 = vmatmul.f32.gmra.mxu0 %v316
        %v335 = vpop.f32.mrf.mxu0
        %v336 = vadd.f32 0.0, %v335
        %337 = vdwg.mxu0
        %v338 = vrcp.pop %v314
        %v339 = vmul.f32 %v314, %v338
        %v340 = vsub.f32 1.0, %v339
        %v341 = vmul.f32 %v338, %v340
        %v342 = vadd.f32 %v338, %v341
        %vm343 = vweird.f32 %v314
        %vm344 = vweird.f32 %v338
        %vm345 = vmor %vm343, %vm344
        %v346 = vsel %vm345, %v338, %v342
        %v347 = vand.u32 2147483647, %v314
        %vm348 = vcmp.eq.f32.partialorder %v347, 8.507059e+37
        %v349 = vand.u32 %v314, 2147483648
        %v350 = vor.u32 1.1754944e-38, %v349
        %v351 = vsel %vm348, %v350, %v346
        %v352 = vmul.f32 %v336, %v351
        %353 = vrot.lane.b32.xlu0 %v271, 120
        %v354 = vpop.permute.xlu0 %353
        %355 = vrot.lane.b32.xlu0 %v272, 120
        %v356 = vpop.permute.xlu0 %355
        %v357 = vsel %vm278, %v354, 0
        %v359 = vsel %vm278, %v356, 0
        %361 = vmatpush.xpose.msra.mxu0 0.0
        %362 = vmatpush.xpose.msra.mxu0 0.0
        %363 = vmatpush.xpose.msra.mxu0 0.0
        %364 = vmatpush.xpose.msra.mxu0 0.0
        %365 = vmatpush.xpose.msra.mxu0 0.0
        %366 = vmatpush.xpose.msra.mxu0 0.0
        %367 = vmatpush.xpose.msra.mxu0 0.0
        %368 = vmatpush.xpose.msra.mxu0 0.0
        %369 = vmatpush.xpose.msra.mxu0 0.0
        %370 = vmatpush.xpose.msra.mxu0 0.0
        %371 = vmatpush.xpose.msra.mxu0 0.0
        %372 = vmatpush.xpose.msra.mxu0 0.0
        %373 = vmatpush.xpose.msra.mxu0 0.0
        %374 = vmatpush.xpose.msra.mxu0 0.0
        %375 = vmatpush.xpose.msra.mxu0 0.0
        %376 = vmatpush.xpose.msra.mxu0 %v359
        %377 = vmatmul.f32.gmra.mxu0 %v357
        %v378 = vpop.f32.mrf.mxu0
        %v379 = vadd.f32 0.0, %v378
        %380 = vdwg.mxu0
        %v381 = vmul.f32 %v379, 0.35355338
        %v382 = vsel %vm278, %v381, -inf
        %383 = vmax.xlane.f32.xlu0 %v382
        %v384 = vpop.xlane.xlu0 %383
        %v385 = vsub.f32 %v381, %v384
        %v386 = vmul.f32 %v385, 1.442695
        %v387 = vpow.pop %v386
        %v388 = vsel %vm278, %v387, 0.0
        %389 = vadd.xlane.f32.xlu0 %v388
        %v390 = vpop.xlane.xlu0 %389
        %392 = vrot.lane.b32.xlu0 %v273, 120
        %v393 = vpop.permute.xlu0 %392
        %v396 = vsel %vm278, %v387, 0
        %398 = vmatpush.msra.mxu0 0.0
        %399 = vmatpush.msra.mxu0 0.0
        %400 = vmatpush.msra.mxu0 0.0
        %401 = vmatpush.msra.mxu0 0.0
        %402 = vmatpush.msra.mxu0 0.0
        %403 = vmatpush.msra.mxu0 0.0
        %404 = vmatpush.msra.mxu0 0.0
        %405 = vmatpush.msra.mxu0 0.0
        %406 = vmatpush.msra.mxu0 0.0
        %407 = vmatpush.msra.mxu0 0.0
        %408 = vmatpush.msra.mxu0 0.0
        %409 = vmatpush.msra.mxu0 0.0
        %410 = vmatpush.msra.mxu0 0.0
        %411 = vmatpush.msra.mxu0 0.0
        %412 = vmatpush.msra.mxu0 0.0
        %413 = vmatpush.msra.mxu0 %v393
        %414 = vmatmul.f32.gmra.mxu0 %v396
        %v415 = vpop.f32.mrf.mxu0
        %v416 = vadd.f32 0.0, %v415
        %417 = vdwg.mxu0
        %v418 = vrcp.pop %v390
        %v419 = vmul.f32 %v390, %v418
        %v420 = vsub.f32 1.0, %v419
        %v421 = vmul.f32 %v418, %v420
        %v422 = vadd.f32 %v418, %v421
        %vm423 = vweird.f32 %v390
        %vm424 = vweird.f32 %v418
        %vm425 = vmor %vm423, %vm424
        %v426 = vsel %vm425, %v418, %v422
        %v427 = vand.u32 2147483647, %v390
        %vm428 = vcmp.eq.f32.partialorder %v427, 8.507059e+37
        %v429 = vand.u32 %v390, 2147483648
        %v430 = vor.u32 1.1754944e-38, %v429
        %v431 = vsel %vm428, %v430, %v426
        %v432 = vmul.f32 %v416, %v431
        %437 = vrot.lane.b32.xlu0 %v274, 120
        %v438 = vpop.permute.xlu0 %437
        %439 = vrot.lane.b32.xlu0 %v275, 120
        %v440 = vpop.permute.xlu0 %439
        %441 = vrot.lane.b32.xlu0 %v276, 120
        %v442 = vpop.permute.xlu0 %441
        %443 = vrot.lane.b32.xlu0 %v277, 120
        %v444 = vpop.permute.xlu0 %443
        %v446 = vsel %vm278, %v432, 0
        %v448 = vsel %vm278, %v438, 0
        %v450 = vsel %vm278, %v440, 0
        %v452 = vsel %vm278, %v442, 0
        %v454 = vsel %vm278, %v444, 0
        %456 = vmatpush.xpose.msra.mxu0 0.0
        %457 = vmatpush.xpose.msra.mxu0 0.0
        %458 = vmatpush.xpose.msra.mxu0 0.0
        %459 = vmatpush.xpose.msra.mxu0 0.0
        %460 = vmatpush.xpose.msra.mxu0 0.0
        %461 = vmatpush.xpose.msra.mxu0 0.0
        %462 = vmatpush.xpose.msra.mxu0 0.0
        %463 = vmatpush.xpose.msra.mxu0 0.0
        %464 = vmatpush.xpose.msra.mxu0 0.0
        %465 = vmatpush.xpose.msra.mxu0 0.0
        %466 = vmatpush.xpose.msra.mxu0 0.0
        %467 = vmatpush.xpose.msra.mxu0 0.0
        %468 = vmatpush.xpose.msra.mxu0 %v454
        %469 = vmatpush.xpose.msra.mxu0 %v452
        %470 = vmatpush.xpose.msra.mxu0 %v450
        %471 = vmatpush.xpose.msra.mxu0 %v448
        %472 = vmatmul.f32.gmra.mxu0 %v446
        %v473 = vpop.f32.mrf.mxu0
        %v474 = vadd.f32 0.0, %v473
        %475 = vdwg.mxu0
        %v477 = vsel %vm278, %v352, 0
        %v479 = vsel %vm278, %v274, 0
        %v481 = vsel %vm278, %v275, 0
        %v483 = vsel %vm278, %v276, 0
        %v485 = vsel %vm278, %v277, 0
        %487 = vmatpush.xpose.msra.mxu0 0.0
        %488 = vmatpush.xpose.msra.mxu0 0.0
        %489 = vmatpush.xpose.msra.mxu0 0.0
        %490 = vmatpush.xpose.msra.mxu0 0.0
        %491 = vmatpush.xpose.msra.mxu0 0.0
        %492 = vmatpush.xpose.msra.mxu0 0.0
        %493 = vmatpush.xpose.msra.mxu0 0.0
        %494 = vmatpush.xpose.msra.mxu0 0.0
        %495 = vmatpush.xpose.msra.mxu0 0.0
        %496 = vmatpush.xpose.msra.mxu0 0.0
        %497 = vmatpush.xpose.msra.mxu0 0.0
        %498 = vmatpush.xpose.msra.mxu0 0.0
        %499 = vmatpush.xpose.msra.mxu0 %v485
        %500 = vmatpush.xpose.msra.mxu0 %v483
        %501 = vmatpush.xpose.msra.mxu0 %v481
        %502 = vmatpush.xpose.msra.mxu0 %v479
        %503 = vmatmul.f32.gmra.mxu0 %v477
        %v504 = vpop.f32.mrf.mxu0
        %v505 = vadd.f32 %v474, %v504
        %506 = vdwg.mxu0
        %507 = vrot.lane.b32.xlu0 %v271, 112
        %v508 = vpop.permute.xlu0 %507
        %509 = vrot.lane.b32.xlu0 %v272, 112
        %v510 = vpop.permute.xlu0 %509
        %v511 = vsel %vm278, %v508, 0
        %v513 = vsel %vm278, %v510, 0
        %515 = vmatpush.xpose.msra.mxu0 0.0
        %516 = vmatpush.xpose.msra.mxu0 0.0
        %517 = vmatpush.xpose.msra.mxu0 0.0
        %518 = vmatpush.xpose.msra.mxu0 0.0
        %519 = vmatpush.xpose.msra.mxu0 0.0
        %520 = vmatpush.xpose.msra.mxu0 0.0
        %521 = vmatpush.xpose.msra.mxu0 0.0
        %522 = vmatpush.xpose.msra.mxu0 0.0
        %523 = vmatpush.xpose.msra.mxu0 0.0
        %524 = vmatpush.xpose.msra.mxu0 0.0
        %525 = vmatpush.xpose.msra.mxu0 0.0
        %526 = vmatpush.xpose.msra.mxu0 0.0
        %527 = vmatpush.xpose.msra.mxu0 0.0
        %528 = vmatpush.xpose.msra.mxu0 0.0
        %529 = vmatpush.xpose.msra.mxu0 0.0
        %530 = vmatpush.xpose.msra.mxu0 %v513
        %531 = vmatmul.f32.gmra.mxu0 %v511
        %v532 = vpop.f32.mrf.mxu0
        %v533 = vadd.f32 0.0, %v532
        %534 = vdwg.mxu0
        %v535 = vmul.f32 %v533, 0.35355338
        %v536 = vsel %vm278, %v535, -inf
        %537 = vmax.xlane.f32.xlu0 %v536
        %v538 = vpop.xlane.xlu0 %537
        %v539 = vsub.f32 %v535, %v538
        %v540 = vmul.f32 %v539, 1.442695
        %v541 = vpow.pop %v540
        %v542 = vsel %vm278, %v541, 0.0
        %543 = vadd.xlane.f32.xlu0 %v542
        %v544 = vpop.xlane.xlu0 %543
        %545 = vrot.lane.b32.xlu0 %v273, 112
        %v546 = vpop.permute.xlu0 %545
        %v549 = vsel %vm278, %v541, 0
        %551 = vmatpush.msra.mxu0 0.0
        %552 = vmatpush.msra.mxu0 0.0
        %553 = vmatpush.msra.mxu0 0.0
        %554 = vmatpush.msra.mxu0 0.0
        %555 = vmatpush.msra.mxu0 0.0
        %556 = vmatpush.msra.mxu0 0.0
        %557 = vmatpush.msra.mxu0 0.0
        %558 = vmatpush.msra.mxu0 0.0
        %559 = vmatpush.msra.mxu0 0.0
        %560 = vmatpush.msra.mxu0 0.0
        %561 = vmatpush.msra.mxu0 0.0
        %562 = vmatpush.msra.mxu0 0.0
        %563 = vmatpush.msra.mxu0 0.0
        %564 = vmatpush.msra.mxu0 0.0
        %565 = vmatpush.msra.mxu0 0.0
        %566 = vmatpush.msra.mxu0 %v546
        %567 = vmatmul.f32.gmra.mxu0 %v549
        %v568 = vpop.f32.mrf.mxu0
        %v569 = vadd.f32 0.0, %v568
        %570 = vdwg.mxu0
        %v571 = vrcp.pop %v544
        %v572 = vmul.f32 %v544, %v571
        %v573 = vsub.f32 1.0, %v572
        %v574 = vmul.f32 %v571, %v573
        %v575 = vadd.f32 %v571, %v574
        %vm576 = vweird.f32 %v544
        %vm577 = vweird.f32 %v571
        %vm578 = vmor %vm576, %vm577
        %v579 = vsel %vm578, %v571, %v575
        %v580 = vand.u32 2147483647, %v544
        %vm581 = vcmp.eq.f32.partialorder %v580, 8.507059e+37
        %v582 = vand.u32 %v544, 2147483648
        %v583 = vor.u32 1.1754944e-38, %v582
        %v584 = vsel %vm581, %v583, %v579
        %v585 = vmul.f32 %v569, %v584
        %586 = vrot.lane.b32.xlu0 %v274, 112
        %v587 = vpop.permute.xlu0 %586
        %588 = vrot.lane.b32.xlu0 %v275, 112
        %v589 = vpop.permute.xlu0 %588
        %590 = vrot.lane.b32.xlu0 %v276, 112
        %v591 = vpop.permute.xlu0 %590
        %592 = vrot.lane.b32.xlu0 %v277, 112
        %v593 = vpop.permute.xlu0 %592
        %v595 = vsel %vm278, %v585, 0
        %v597 = vsel %vm278, %v587, 0
        %v599 = vsel %vm278, %v589, 0
        %v601 = vsel %vm278, %v591, 0
        %v603 = vsel %vm278, %v593, 0
        %605 = vmatpush.xpose.msra.mxu0 0.0
        %606 = vmatpush.xpose.msra.mxu0 0.0
        %607 = vmatpush.xpose.msra.mxu0 0.0
        %608 = vmatpush.xpose.msra.mxu0 0.0
        %609 = vmatpush.xpose.msra.mxu0 0.0
        %610 = vmatpush.xpose.msra.mxu0 0.0
        %611 = vmatpush.xpose.msra.mxu0 0.0
        %612 = vmatpush.xpose.msra.mxu0 0.0
        %613 = vmatpush.xpose.msra.mxu0 0.0
        %614 = vmatpush.xpose.msra.mxu0 0.0
        %615 = vmatpush.xpose.msra.mxu0 0.0
        %616 = vmatpush.xpose.msra.mxu0 0.0
        %617 = vmatpush.xpose.msra.mxu0 %v603
        %618 = vmatpush.xpose.msra.mxu0 %v601
        %619 = vmatpush.xpose.msra.mxu0 %v599
        %620 = vmatpush.xpose.msra.mxu0 %v597
        %621 = vmatmul.f32.gmra.mxu0 %v595
        %v622 = vpop.f32.mrf.mxu0
        %v623 = vadd.f32 0.0, %v622
        %624 = vdwg.mxu0
        %v625 = vadd.f32 %v505, %v623
        %626 = vrot.lane.b32.xlu0 %v271, 104
        %v627 = vpop.permute.xlu0 %626
        %628 = vrot.lane.b32.xlu0 %v272, 104
        %v629 = vpop.permute.xlu0 %628
        %v630 = vsel %vm278, %v627, 0
        %v632 = vsel %vm278, %v629, 0
        %634 = vmatpush.xpose.msra.mxu0 0.0
        %635 = vmatpush.xpose.msra.mxu0 0.0
        %636 = vmatpush.xpose.msra.mxu0 0.0
        %637 = vmatpush.xpose.msra.mxu0 0.0
        %638 = vmatpush.xpose.msra.mxu0 0.0
        %639 = vmatpush.xpose.msra.mxu0 0.0
        %640 = vmatpush.xpose.msra.mxu0 0.0
        %641 = vmatpush.xpose.msra.mxu0 0.0
        %642 = vmatpush.xpose.msra.mxu0 0.0
        %643 = vmatpush.xpose.msra.mxu0 0.0
        %644 = vmatpush.xpose.msra.mxu0 0.0
        %645 = vmatpush.xpose.msra.mxu0 0.0
        %646 = vmatpush.xpose.msra.mxu0 0.0
        %647 = vmatpush.xpose.msra.mxu0 0.0
        %648 = vmatpush.xpose.msra.mxu0 0.0
        %649 = vmatpush.xpose.msra.mxu0 %v632
        %650 = vmatmul.f32.gmra.mxu0 %v630
        %v651 = vpop.f32.mrf.mxu0
        %v652 = vadd.f32 0.0, %v651
        %653 = vdwg.mxu0
        %v654 = vmul.f32 %v652, 0.35355338
        %v655 = vsel %vm278, %v654, -inf
        %656 = vmax.xlane.f32.xlu0 %v655
        %v657 = vpop.xlane.xlu0 %656
        %v658 = vsub.f32 %v654, %v657
        %v659 = vmul.f32 %v658, 1.442695
        %v660 = vpow.pop %v659
        %v661 = vsel %vm278, %v660, 0.0
        %662 = vadd.xlane.f32.xlu0 %v661
        %v663 = vpop.xlane.xlu0 %662
        %664 = vrot.lane.b32.xlu0 %v273, 104
        %v665 = vpop.permute.xlu0 %664
        %v668 = vsel %vm278, %v660, 0
        %670 = vmatpush.msra.mxu0 0.0
        %671 = vmatpush.msra.mxu0 0.0
        %672 = vmatpush.msra.mxu0 0.0
        %673 = vmatpush.msra.mxu0 0.0
        %674 = vmatpush.msra.mxu0 0.0
        %675 = vmatpush.msra.mxu0 0.0
        %676 = vmatpush.msra.mxu0 0.0
        %677 = vmatpush.msra.mxu0 0.0
        %678 = vmatpush.msra.mxu0 0.0
        %679 = vmatpush.msra.mxu0 0.0
        %680 = vmatpush.msra.mxu0 0.0
        %681 = vmatpush.msra.mxu0 0.0
        %682 = vmatpush.msra.mxu0 0.0
        %683 = vmatpush.msra.mxu0 0.0
        %684 = vmatpush.msra.mxu0 0.0
        %685 = vmatpush.msra.mxu0 %v665
        %686 = vmatmul.f32.gmra.mxu0 %v668
        %v687 = vpop.f32.mrf.mxu0
        %v688 = vadd.f32 0.0, %v687
        %689 = vdwg.mxu0
        %v690 = vrcp.pop %v663
        %v691 = vmul.f32 %v663, %v690
        %v692 = vsub.f32 1.0, %v691
        %v693 = vmul.f32 %v690, %v692
        %v694 = vadd.f32 %v690, %v693
        %vm695 = vweird.f32 %v663
        %vm696 = vweird.f32 %v690
        %vm697 = vmor %vm695, %vm696
        %v698 = vsel %vm697, %v690, %v694
        %v699 = vand.u32 2147483647, %v663
        %vm700 = vcmp.eq.f32.partialorder %v699, 8.507059e+37
        %v701 = vand.u32 %v663, 2147483648
        %v702 = vor.u32 1.1754944e-38, %v701
        %v703 = vsel %vm700, %v702, %v698
        %v704 = vmul.f32 %v688, %v703
        %705 = vrot.lane.b32.xlu0 %v274, 104
        %v706 = vpop.permute.xlu0 %705
        %707 = vrot.lane.b32.xlu0 %v275, 104
        %v708 = vpop.permute.xlu0 %707
        %709 = vrot.lane.b32.xlu0 %v276, 104
        %v710 = vpop.permute.xlu0 %709
        %711 = vrot.lane.b32.xlu0 %v277, 104
        %v712 = vpop.permute.xlu0 %711
        %v714 = vsel %vm278, %v704, 0
        %v716 = vsel %vm278, %v706, 0
        %v718 = vsel %vm278, %v708, 0
        %v720 = vsel %vm278, %v710, 0
        %v722 = vsel %vm278, %v712, 0
        %724 = vmatpush.xpose.msra.mxu0 0.0
        %725 = vmatpush.xpose.msra.mxu0 0.0
        %726 = vmatpush.xpose.msra.mxu0 0.0
        %727 = vmatpush.xpose.msra.mxu0 0.0
        %728 = vmatpush.xpose.msra.mxu0 0.0
        %729 = vmatpush.xpose.msra.mxu0 0.0
        %730 = vmatpush.xpose.msra.mxu0 0.0
        %731 = vmatpush.xpose.msra.mxu0 0.0
        %732 = vmatpush.xpose.msra.mxu0 0.0
        %733 = vmatpush.xpose.msra.mxu0 0.0
        %734 = vmatpush.xpose.msra.mxu0 0.0
        %735 = vmatpush.xpose.msra.mxu0 0.0
        %736 = vmatpush.xpose.msra.mxu0 %v722
        %737 = vmatpush.xpose.msra.mxu0 %v720
        %738 = vmatpush.xpose.msra.mxu0 %v718
        %739 = vmatpush.xpose.msra.mxu0 %v716
        %740 = vmatmul.f32.gmra.mxu0 %v714
        %v741 = vpop.f32.mrf.mxu0
        %v742 = vadd.f32 0.0, %v741
        %743 = vdwg.mxu0
        %v744 = vadd.f32 %v625, %v742
        %v745 = vld [vmem:[%s4] sm:$0x1]
        %v747 = vperm.slane %v745, 0
        %v749 = vadd.f32 %v744, %v747
        %vm750 = vcmask 261120
        %751 = vst.msk [vmem:[%s258] sm:$0xff] %vm750, %v749
        %s752 = sand.u32 %s148, 1
        %s753 = scalar_lea.sflag [#allocation4], %s752
        %s754 = sand.u32 %s148, 1
        %s755 = smul.addr %s754, 8
        %s756 = scalar_lea.vmem [#allocation5], %s755
        // Predicated region
        $region45: #{attention_forward.3} parent=39 // pred_check
          %p757 = pneg %p158
        $region46: #{attention_forward.3} parent=39 // pred_check_branch
          %759 = sbr.rel (%p757) target = $region48
        $region47: #{attention_forward.3} parent=39 // pred_region
          %761 = vsyncadd %s753, 0
          %s762 = smul.addr %s20, 8
          %s763 = scalar_lea.hbm %s5, %s762
          %s765 = sshll.u32 %s756, 4
          %s766 = int_to_ptr.vmem [resolvable:$true] %s765
          %s767 = sshll.u32 %s763, 4
          %s768 = int_to_ptr.hbm [resolvable:$true] %s767
          %770 = dma.vmem_to_hbm [thread:$0]  %s766, 128, %s768, %s753
        $region48: #{attention_forward.3} parent=39 // pred_fallthru
          _
      $region40: #{attention_forward.3} parent=5 // pred_fallthru
        _
      %p771 = scmp.le.s32.totalorder 2, %s15
      // Predicated region
      $region49: #{attention_forward.3} parent=5 // pred_check
        %p772 = pneg %p771
      $region50: #{attention_forward.3} parent=5 // pred_check_branch
        %774 = sbr.rel (%p772) target = $region52
      $region51: #{attention_forward.3} parent=5 // pred_region
        %s775 = ssub.s32 %s15, 2
        // Predicated region
        $region53: #{attention_forward.3} parent=51 // pred_check
          %p776 = pneg %p164
        $region54: #{attention_forward.3} parent=51 // pred_check_branch
          %778 = sbr.rel (%p776) target = $region56
        $region55: #{attention_forward.3} parent=51 // pred_region
          %s779 = sand.u32 %s149, 1
          %s780 = scalar_lea.sflag [#allocation4], %s779
          %s781 = sand.u32 %s149, 1
          %s782 = smul.addr %s781, 8
          %s783 = scalar_lea.vmem [#allocation5], %s782
          %785 = dma.done %s780, 128
        $region56: #{attention_forward.3} parent=51 // pred_fallthru
          _
      $region52: #{attention_forward.3} parent=5 // pred_fallthru
        _
    $region6: #{attention_forward.3} parent=1 // loop_footer
      %s19 = sadd.s32 1, %s15
    $region7: #{attention_forward.3} parent=1 // loop_footer_branch
      %14 = sbr.rel target = $region3
    $region8: #{attention_forward.3} parent=1 // loop_exit
      _
    %786 = vsyncpa [#allocation3], 1
    %s787 = scalar_lea.sflag [#allocation3], 1
    %788 = vsyncpa %s787, 1
    %789 = vsyncpa [#allocation4], 1
    %s790 = scalar_lea.sflag [#allocation4], 1
    %791 = vsyncpa %s790, 1

// kernel: attention_forward.2
$region0: #{attention_forward.2}
  #allocation0 [shape = 'u32[]', space=smem, size = 0x4, offset = 0x4, fixed_abs, tag = 'smem constant byte address 0x4 - core index']
  #allocation1 [shape = 'u32[72,128]{1,0:T(1,128)}', space=vmem, size = 0x9000, scoped, tag = 'internal scratch']
  %s0 = inlined_call_operand.hbm [shape: f32[16,32], index: 0, kind: input, shape index: {}]
  %s1 = inlined_call_operand.hbm [shape: f32[16,32], index: 1, kind: input, shape index: {}]
  %s2 = inlined_call_operand.vmem [shape: f32[16,32], index: 2, kind: input, shape index: {}]
  %s3 = inlined_call_operand.hbm [shape: f32[32,32], index: 3, kind: input, shape index: {}]
  %s4 = inlined_call_operand.hbm [shape: f32[32,32], index: 4, kind: input, shape index: {}]
  %s5 = inlined_call_operand.hbm [shape: f32[32,32], index: 5, kind: input, shape index: {}]
  %s6 = inlined_call_operand.hbm [shape: f32[1,32], index: 6, kind: input, shape index: {}]
  %s7 = inlined_call_operand.hbm [shape: f32[1,32], index: 7, kind: input, shape index: {}]
  %s8 = inlined_call_operand.hbm [shape: f32[1,32], index: 8, kind: input, shape index: {}]
  %s9 = inlined_call_operand.vmem [shape: f32[16,32], index: 9, kind: output, shape index: {0}]
  %s10 = inlined_call_operand.vmem [shape: f32[16,32], index: 10, kind: output, shape index: {1}]
  %s11 = inlined_call_operand.vmem [shape: f32[16,32], index: 11, kind: output, shape index: {2}]
  %12 = xla_tuple %s9, %s10, %s11
  %s13 = sld [smem:[#allocation0]]
  $region94: #{attention_forward.2} parent=0
    _
  %s15 = ssub.s32 1, %s13
  %s16 = scalar_select 0, %s15, %s13
  $region1: #{attention_forward.2} parent=0
    #allocation2 [shape = 'u8[8192]{0}', space=vmem, size = 0x2000, scoped, tag = 'input window, operand 0, single buffered']
    #allocation3 [shape = 's32[1]{0}', space=sflag, size = 0x4, scoped, tag = 'scoped memory for attention_forward.2']
    #allocation4 [shape = 'u8[8192]{0}', space=vmem, size = 0x2000, scoped, tag = 'input window, operand 1, single buffered']
    #allocation5 [shape = 's32[1]{0}', space=sflag, size = 0x4, scoped, tag = 'scoped memory for attention_forward.2']
    #allocation6 [shape = 'u8[16384]{0}', space=vmem, size = 0x4000, scoped, tag = 'input window, operand 3, single buffered']
    #allocation7 [shape = 'u8[16384]{0}', space=vmem, size = 0x4000, scoped, tag = 'input window, operand 4, single buffered']
    #allocation8 [shape = 's32[1]{0}', space=sflag, size = 0x4, scoped, tag = 'scoped memory for attention_forward.2']
    #allocation9 [shape = 'u8[16384]{0}', space=vmem, size = 0x4000, scoped, tag = 'input window, operand 5, single buffered']
    #allocation10 [shape = 'u8[512]{0}', space=vmem, size = 0x400, scoped, tag = 'input window, operand 6, single buffered']
    #allocation11 [shape = 's32[1]{0}', space=sflag, size = 0x4, scoped, tag = 'scoped memory for attention_forward.2']
    #allocation12 [shape = 'u8[512]{0}', space=vmem, size = 0x400, scoped, tag = 'input window, operand 7, single buffered']
    #allocation13 [shape = 'u8[512]{0}', space=vmem, size = 0x400, scoped, tag = 'input window, operand 8, single buffered']
    #allocation14 [shape = 's32[1]{0}', space=sflag, size = 0x4, scoped, tag = 'scoped memory for attention_forward.2']
    %17 = vsyncpa [#allocation3], 0
    %18 = vsyncpa [#allocation5], 0
    %19 = vsyncpa [#allocation8], 0
    %20 = vsyncpa [#allocation11], 0
    %21 = vsyncpa [#allocation14], 0
    // Predicated region
    $region2: #{attention_forward.2} parent=1 // pred_check
      _
    $region3: #{attention_forward.2} parent=1 // pred_check_branch
      %23 = sbr.rel (0) target = $region5
    $region4: #{attention_forward.2} parent=1 // pred_region
      %25 = vsyncadd [#allocation3], 0
      %s26 = sshll.u32 %s0, 4
      %s27 = int_to_ptr.hbm [resolvable:$true] %s26
      %s28 = sshll.u32 [#allocation2], 4
      %s29 = int_to_ptr.vmem [resolvable:$true] %s28
      %34 = dma.hbm_to_vmem [thread:$0]  %s27, 256, %s29, [#allocation3], 128, 128, 8
    $region5: #{attention_forward.2} parent=1 // pred_fallthru
      _
    // Predicated region
    $region6: #{attention_forward.2} parent=1 // pred_check
      _
    $region7: #{attention_forward.2} parent=1 // pred_check_branch
      %36 = sbr.rel (0) target = $region9
    $region8: #{attention_forward.2} parent=1 // pred_region
      %38 = vsyncadd [#allocation5], 0
      %s39 = sshll.u32 %s1, 4
      %s40 = int_to_ptr.hbm [resolvable:$true] %s39
      %s41 = sshll.u32 [#allocation4], 4
      %s42 = int_to_ptr.vmem [resolvable:$true] %s41
      %47 = dma.hbm_to_vmem [thread:$0]  %s40, 256, %s42, [#allocation5], 128, 128, 8
    $region9: #{attention_forward.2} parent=1 // pred_fallthru
      _
    // Predicated region
    $region10: #{attention_forward.2} parent=1 // pred_check
      _
    $region11: #{attention_forward.2} parent=1 // pred_check_branch
      %49 = sbr.rel (0) target = $region13
    $region12: #{attention_forward.2} parent=1 // pred_region
      _
    $region13: #{attention_forward.2} parent=1 // pred_fallthru
      _
    // Predicated region
    $region14: #{attention_forward.2} parent=1 // pred_check
      _
    $region15: #{attention_forward.2} parent=1 // pred_check_branch
      %51 = sbr.rel (0) target = $region17
    $region16: #{attention_forward.2} parent=1 // pred_region
      %53 = vsyncadd [#allocation5], 0
      %s54 = sshll.u32 %s3, 4
      %s55 = int_to_ptr.hbm [resolvable:$true] %s54
      %s56 = sshll.u32 [#allocation6], 4
      %s57 = int_to_ptr.vmem [resolvable:$true] %s56
      %62 = dma.hbm_to_vmem [thread:$0]  %s55, 512, %s57, [#allocation5], 128, 128, 8
    $region17: #{attention_forward.2} parent=1 // pred_fallthru
      _
    // Predicated region
    $region18: #{attention_forward.2} parent=1 // pred_check
      _
    $region19: #{attention_forward.2} parent=1 // pred_check_branch
      %64 = sbr.rel (0) target = $region21
    $region20: #{attention_forward.2} parent=1 // pred_region
      %66 = vsyncadd [#allocation8], 0
      %s67 = sshll.u32 %s4, 4
      %s68 = int_to_ptr.hbm [resolvable:$true] %s67
      %s69 = sshll.u32 [#allocation7], 4
      %s70 = int_to_ptr.vmem [resolvable:$true] %s69
      %75 = dma.hbm_to_vmem [thread:$0]  %s68, 512, %s70, [#allocation8], 128, 128, 8
    $region21: #{attention_forward.2} parent=1 // pred_fallthru
      _
    // Predicated region
    $region22: #{attention_forward.2} parent=1 // pred_check
      _
    $region23: #{attention_forward.2} parent=1 // pred_check_branch
      %77 = sbr.rel (0) target = $region25
    $region24: #{attention_forward.2} parent=1 // pred_region
      %79 = vsyncadd [#allocation8], 0
      %s80 = sshll.u32 %s5, 4
      %s81 = int_to_ptr.hbm [resolvable:$true] %s80
      %s82 = sshll.u32 [#allocation9], 4
      %s83 = int_to_ptr.vmem [resolvable:$true] %s82
      %88 = dma.hbm_to_vmem [thread:$0]  %s81, 512, %s83, [#allocation8], 128, 128, 8
    $region25: #{attention_forward.2} parent=1 // pred_fallthru
      _
    // Predicated region
    $region26: #{attention_forward.2} parent=1 // pred_check
      _
    $region27: #{attention_forward.2} parent=1 // pred_check_branch
      %90 = sbr.rel (0) target = $region29
    $region28: #{attention_forward.2} parent=1 // pred_region
      %92 = vsyncadd [#allocation11], 0
      %s94 = sshll.u32 %s6, 4
      %s95 = int_to_ptr.hbm [resolvable:$true] %s94
      %s96 = sshll.u32 [#allocation10], 4
      %s97 = int_to_ptr.vmem [resolvable:$true] %s96
      %99 = dma.hbm_to_vmem [thread:$0]  %s95, 16, %s97, [#allocation11]
    $region29: #{attention_forward.2} parent=1 // pred_fallthru
      _
    // Predicated region
    $region30: #{attention_forward.2} parent=1 // pred_check
      _
    $region31: #{attention_forward.2} parent=1 // pred_check_branch
      %101 = sbr.rel (0) target = $region33
    $region32: #{attention_forward.2} parent=1 // pred_region
      %103 = vsyncadd [#allocation11], 0
      %s105 = sshll.u32 %s7, 4
      %s106 = int_to_ptr.hbm [resolvable:$true] %s105
      %s107 = sshll.u32 [#allocation12], 4
      %s108 = int_to_ptr.vmem [resolvable:$true] %s107
      %110 = dma.hbm_to_vmem [thread:$0]  %s106, 16, %s108, [#allocation11]
    $region33: #{attention_forward.2} parent=1 // pred_fallthru
      _
    // Predicated region
    $region34: #{attention_forward.2} parent=1 // pred_check
      _
    $region35: #{attention_forward.2} parent=1 // pred_check_branch
      %112 = sbr.rel (0) target = $region37
    $region36: #{attention_forward.2} parent=1 // pred_region
      %114 = vsyncadd [#allocation14], 0
      %s116 = sshll.u32 %s8, 4
      %s117 = int_to_ptr.hbm [resolvable:$true] %s116
      %s118 = sshll.u32 [#allocation13], 4
      %s119 = int_to_ptr.vmem [resolvable:$true] %s118
      %121 = dma.hbm_to_vmem [thread:$0]  %s117, 16, %s119, [#allocation14]
    $region37: #{attention_forward.2} parent=1 // pred_fallthru
      _
    // Predicated region
    $region38: #{attention_forward.2} parent=1 // pred_check
      _
    $region39: #{attention_forward.2} parent=1 // pred_check_branch
      %123 = sbr.rel (0) target = $region41
    $region40: #{attention_forward.2} parent=1 // pred_region
      %125 = dma.done [#allocation3], 256
    $region41: #{attention_forward.2} parent=1 // pred_fallthru
      _
    // Predicated region
    $region42: #{attention_forward.2} parent=1 // pred_check
      _
    $region43: #{attention_forward.2} parent=1 // pred_check_branch
      %127 = sbr.rel (0) target = $region45
    $region44: #{attention_forward.2} parent=1 // pred_region
      %129 = dma.done [#allocation5], 256
    $region45: #{attention_forward.2} parent=1 // pred_fallthru
      _
    // Predicated region
    $region46: #{attention_forward.2} parent=1 // pred_check
      _
    $region47: #{attention_forward.2} parent=1 // pred_check_branch
      %131 = sbr.rel (0) target = $region49
    $region48: #{attention_forward.2} parent=1 // pred_region
      %133 = dma.done [#allocation5], 512
    $region49: #{attention_forward.2} parent=1 // pred_fallthru
      _
    // Predicated region
    $region50: #{attention_forward.2} parent=1 // pred_check
      _
    $region51: #{attention_forward.2} parent=1 // pred_check_branch
      %135 = sbr.rel (0) target = $region53
    $region52: #{attention_forward.2} parent=1 // pred_region
      %137 = dma.done [#allocation8], 512
    $region53: #{attention_forward.2} parent=1 // pred_fallthru
      _
    // Predicated region
    $region54: #{attention_forward.2} parent=1 // pred_check
      _
    $region55: #{attention_forward.2} parent=1 // pred_check_branch
      %139 = sbr.rel (0) target = $region57
    $region56: #{attention_forward.2} parent=1 // pred_region
      %141 = dma.done [#allocation8], 512
    $region57: #{attention_forward.2} parent=1 // pred_fallthru
      _
    // Predicated region
    $region58: #{attention_forward.2} parent=1 // pred_check
      _
    $region59: #{attention_forward.2} parent=1 // pred_check_branch
      %143 = sbr.rel (0) target = $region61
    $region60: #{attention_forward.2} parent=1 // pred_region
      %145 = dma.done [#allocation11], 16
    $region61: #{attention_forward.2} parent=1 // pred_fallthru
      _
    // Predicated region
    $region62: #{attention_forward.2} parent=1 // pred_check
      _
    $region63: #{attention_forward.2} parent=1 // pred_check_branch
      %147 = sbr.rel (0) target = $region65
    $region64: #{attention_forward.2} parent=1 // pred_region
      %149 = dma.done [#allocation11], 16
    $region65: #{attention_forward.2} parent=1 // pred_fallthru
      _
    // Predicated region
    $region66: #{attention_forward.2} parent=1 // pred_check
      _
    $region67: #{attention_forward.2} parent=1 // pred_check_branch
      %151 = sbr.rel (0) target = $region69
    $region68: #{attention_forward.2} parent=1 // pred_region
      %153 = dma.done [#allocation14], 16
    $region69: #{attention_forward.2} parent=1 // pred_fallthru
      _
    %v154 = vld [vmem:[#allocation2] sm:$0xff]
    %v155 = vld [vmem:[#allocation2 + $0x8] sm:$0xff]
    %v156 = vld [vmem:[#allocation6] sm:$0xff]
    %v157 = vld [vmem:[#allocation6 + $0x8] sm:$0xff]
    %v158 = vld [vmem:[#allocation6 + $0x10] sm:$0xff]
    %v159 = vld [vmem:[#allocation6 + $0x18] sm:$0xff]
    %v160 = vld [vmem:[#allocation10] sm:$0x1]
    %v162 = vperm.slane %v160, 0
    %vm164 = vcmask 261120
    %v166 = vsel %vm164, %v154, 0
    %v169 = vsel %vm164, %v155, 0
    %v172 = vsel %vm164, %v156, 0
    %v175 = vsel %vm164, %v157, 0
    %v178 = vsel %vm164, %v158, 0
    %v181 = vsel %vm164, %v159, 0
    %183 = vmatpush.xpose.msra.mxu0 0.0
    %184 = vmatpush.xpose.msra.mxu0 0.0
    %185 = vmatpush.xpose.msra.mxu0 0.0
    %186 = vmatpush.xpose.msra.mxu0 0.0
    %187 = vmatpush.xpose.msra.mxu0 0.0
    %188 = vmatpush.xpose.msra.mxu0 0.0
    %189 = vmatpush.xpose.msra.mxu0 0.0
    %190 = vmatpush.xpose.msra.mxu0 0.0
    %191 = vmatpush.xpose.msra.mxu0 0.0
    %192 = vmatpush.xpose.msra.mxu0 0.0
    %193 = vmatpush.xpose.msra.mxu0 0.0
    %194 = vmatpush.xpose.msra.mxu0 0.0
    %195 = vmatpush.xpose.msra.mxu0 %v181
    %196 = vmatpush.xpose.msra.mxu0 %v178
    %197 = vmatpush.xpose.msra.mxu0 %v175
    %198 = vmatpush.xpose.msra.mxu0 %v172
    %199 = vmatmul.f32.gmra.mxu0 %v166
    %v200 = vpop.f32.mrf.mxu0
    %v201 = vadd.f32 %v162, %v200
    %202 = vmatmul.f32.gmra.mxu0 %v169
    %v203 = vpop.f32.mrf.mxu0
    %v204 = vadd.f32 %v162, %v203
    %205 = vdwg.mxu0
    %206 = vst.msk [vmem:[%s9] sm:$0xff] %vm164, %v201
    %207 = vst.msk [vmem:[%s9 + $0x8] sm:$0xff] %vm164, %v204
    %v208 = vld [vmem:[#allocation4] sm:$0xff]
    %v209 = vld [vmem:[#allocation4 + $0x8] sm:$0xff]
    %v210 = vld [vmem:[#allocation7] sm:$0xff]
    %v211 = vld [vmem:[#allocation7 + $0x8] sm:$0xff]
    %v212 = vld [vmem:[#allocation7 + $0x10] sm:$0xff]
    %v213 = vld [vmem:[#allocation7 + $0x18] sm:$0xff]
    %v214 = vld [vmem:[#allocation12] sm:$0x1]
    %v216 = vperm.slane %v214, 0
    %v219 = vsel %vm164, %v208, 0
    %v222 = vsel %vm164, %v209, 0
    %v225 = vsel %vm164, %v210, 0
    %v228 = vsel %vm164, %v211, 0
    %v231 = vsel %vm164, %v212, 0
    %v234 = vsel %vm164, %v213, 0
    %236 = vmatpush.xpose.msra.mxu0 0.0
    %237 = vmatpush.xpose.msra.mxu0 0.0
    %238 = vmatpush.xpose.msra.mxu0 0.0
    %239 = vmatpush.xpose.msra.mxu0 0.0
    %240 = vmatpush.xpose.msra.mxu0 0.0
    %241 = vmatpush.xpose.msra.mxu0 0.0
    %242 = vmatpush.xpose.msra.mxu0 0.0
    %243 = vmatpush.xpose.msra.mxu0 0.0
    %244 = vmatpush.xpose.msra.mxu0 0.0
    %245 = vmatpush.xpose.msra.mxu0 0.0
    %246 = vmatpush.xpose.msra.mxu0 0.0
    %247 = vmatpush.xpose.msra.mxu0 0.0
    %248 = vmatpush.xpose.msra.mxu0 %v234
    %249 = vmatpush.xpose.msra.mxu0 %v231
    %250 = vmatpush.xpose.msra.mxu0 %v228
    %251 = vmatpush.xpose.msra.mxu0 %v225
    %252 = vmatmul.f32.gmra.mxu0 %v219
    %v253 = vpop.f32.mrf.mxu0
    %v254 = vadd.f32 %v216, %v253
    %255 = vmatmul.f32.gmra.mxu0 %v222
    %v256 = vpop.f32.mrf.mxu0
    %v257 = vadd.f32 %v216, %v256
    %258 = vdwg.mxu0
    %259 = vst.msk [vmem:[%s10] sm:$0xff] %vm164, %v254
    %260 = vst.msk [vmem:[%s10 + $0x8] sm:$0xff] %vm164, %v257
    %v261 = vld [vmem:[%s2] sm:$0xff]
    %v262 = vld [vmem:[%s2 + $0x8] sm:$0xff]
    %v263 = vld [vmem:[#allocation9] sm:$0xff]
    %v264 = vld [vmem:[#allocation9 + $0x8] sm:$0xff]
    %v265 = vld [vmem:[#allocation9 + $0x10] sm:$0xff]
    %v266 = vld [vmem:[#allocation9 + $0x18] sm:$0xff]
    %v267 = vld [vmem:[#allocation13] sm:$0x1]
    %v269 = vperm.slane %v267, 0
    %v272 = vsel %vm164, %v261, 0
    %v275 = vsel %vm164, %v262, 0
    %v278 = vsel %vm164, %v263, 0
    %v281 = vsel %vm164, %v264, 0
    %v284 = vsel %vm164, %v265, 0
    %v287 = vsel %vm164, %v266, 0
    %289 = vmatpush.xpose.msra.mxu0 0.0
    %290 = vmatpush.xpose.msra.mxu0 0.0
    %291 = vmatpush.xpose.msra.mxu0 0.0
    %292 = vmatpush.xpose.msra.mxu0 0.0
    %293 = vmatpush.xpose.msra.mxu0 0.0
    %294 = vmatpush.xpose.msra.mxu0 0.0
    %295 = vmatpush.xpose.msra.mxu0 0.0
    %296 = vmatpush.xpose.msra.mxu0 0.0
    %297 = vmatpush.xpose.msra.mxu0 0.0
    %298 = vmatpush.xpose.msra.mxu0 0.0
    %299 = vmatpush.xpose.msra.mxu0 0.0
    %300 = vmatpush.xpose.msra.mxu0 0.0
    %301 = vmatpush.xpose.msra.mxu0 %v287
    %302 = vmatpush.xpose.msra.mxu0 %v284
    %303 = vmatpush.xpose.msra.mxu0 %v281
    %304 = vmatpush.xpose.msra.mxu0 %v278
    %305 = vmatmul.f32.gmra.mxu0 %v272
    %v306 = vpop.f32.mrf.mxu0
    %v307 = vadd.f32 %v269, %v306
    %308 = vmatmul.f32.gmra.mxu0 %v275
    %v309 = vpop.f32.mrf.mxu0
    %v310 = vadd.f32 %v269, %v309
    %311 = vdwg.mxu0
    %312 = vst.msk [vmem:[%s11] sm:$0xff] %vm164, %v307
    %313 = vst.msk [vmem:[%s11 + $0x8] sm:$0xff] %vm164, %v310
    // Predicated region
    $region70: #{attention_forward.2} parent=1 // pred_check
      _
    $region71: #{attention_forward.2} parent=1 // pred_check_branch
      %315 = sbr.rel (0) target = $region73
    $region72: #{attention_forward.2} parent=1 // pred_region
      _
    $region73: #{attention_forward.2} parent=1 // pred_fallthru
      _
    // Predicated region
    $region74: #{attention_forward.2} parent=1 // pred_check
      _
    $region75: #{attention_forward.2} parent=1 // pred_check_branch
      %317 = sbr.rel (0) target = $region77
    $region76: #{attention_forward.2} parent=1 // pred_region
      _
    $region77: #{attention_forward.2} parent=1 // pred_fallthru
      _
    // Predicated region
    $region78: #{attention_forward.2} parent=1 // pred_check
      _
    $region79: #{attention_forward.2} parent=1 // pred_check_branch
      %319 = sbr.rel (0) target = $region81
    $region80: #{attention_forward.2} parent=1 // pred_region
      _
    $region81: #{attention_forward.2} parent=1 // pred_fallthru
      _
    // Predicated region
    $region82: #{attention_forward.2} parent=1 // pred_check
      _
    $region83: #{attention_forward.2} parent=1 // pred_check_branch
      %321 = sbr.rel (0) target = $region85
    $region84: #{attention_forward.2} parent=1 // pred_region
      _
    $region85: #{attention_forward.2} parent=1 // pred_fallthru
      _
    // Predicated region
    $region86: #{attention_forward.2} parent=1 // pred_check
      _
    $region87: #{attention_forward.2} parent=1 // pred_check_branch
      %323 = sbr.rel (0) target = $region89
    $region88: #{attention_forward.2} parent=1 // pred_region
      _
    $region89: #{attention_forward.2} parent=1 // pred_fallthru
      _
    // Predicated region
    $region90: #{attention_forward.2} parent=1 // pred_check
      _
    $region91: #{attention_forward.2} parent=1 // pred_check_branch
      %325 = sbr.rel (0) target = $region93
    $region92: #{attention_forward.2} parent=1 // pred_region
      _
    $region93: #{attention_forward.2} parent=1 // pred_fallthru
      _
    %326 = vsyncpa [#allocation3], 1
    %327 = vsyncpa [#allocation5], 1
    %328 = vsyncpa [#allocation8], 1
    %329 = vsyncpa [#allocation11], 1
    %330 = vsyncpa [#allocation14], 1

</llo_original>
